<compile_context>
chip_gen: v6e
topology: v6e:2x2x1
jax: 0.10.0
libtpu: 0.0.40
codegen_flags: <defaults>
</compile_context>

<pallas_src>
import functools

import jax
import jax.numpy as jnp
from jax.experimental import pallas as pl
from jax.experimental.pallas import tpu as pltpu


def _gnn_kernel(a_in_ref, a_out_ref, h_ref,
                w_ein_ref, b_ein_ref, w_eout_ref, b_eout_ref,
                b_iah_ref, b_oah_ref,
                w_gi_in_ref, w_gi_out_ref, w_gh_ref, b_gi_ref, b_gh_ref,
                out_ref,
                *, bt, n_nodes, hidden_size, n_steps, matmul_dtype):
    N, H = n_nodes, hidden_size
    M = bt * N
    f32 = jnp.float32

    # Loop-invariant loads (A block + all weights/biases), hoisted out of steps.
    a_in = a_in_ref[...]                               # (bt, N, N)  matmul dtype
    a_out = a_out_ref[...]                             # (bt, N, N)
    w_ein = w_ein_ref[...]                             # (H, H)
    w_eout = w_eout_ref[...]                           # (H, H)
    b_ein = b_ein_ref[...]                             # (1, H) f32
    b_eout = b_eout_ref[...]
    b_iah = b_iah_ref[...]
    b_oah = b_oah_ref[...]
    w_gi_in = [w_gi_in_ref[g] for g in range(3)]       # 3 x (H, H)  [r, i, n]
    w_gi_out = [w_gi_out_ref[g] for g in range(3)]
    w_gh = [w_gh_ref[g] for g in range(3)]
    b_gi = [b_gi_ref[g] for g in range(3)]             # 3 x (1, H) f32
    b_gh = [b_gh_ref[g] for g in range(3)]

    def one_step(h):                                   # h: (M, H) f32
        hm = h.astype(matmul_dtype)
        # linear_edge_in / linear_edge_out as flat (M, H) GEMMs.
        eh_in = jnp.dot(hm, w_ein, preferred_element_type=f32) + b_ein
        eh_out = jnp.dot(hm, w_eout, preferred_element_type=f32) + b_eout
        eh_in = eh_in.astype(matmul_dtype).reshape(bt, N, H)
        eh_out = eh_out.astype(matmul_dtype).reshape(bt, N, H)
        # Only the adjacency contraction must stay batched.
        inp_in = jnp.einsum('bij,bjh->bih', a_in, eh_in,
                            preferred_element_type=f32).reshape(M, H) + b_iah
        inp_out = jnp.einsum('bij,bjh->bih', a_out, eh_out,
                             preferred_element_type=f32).reshape(M, H) + b_oah
        ii = inp_in.astype(matmul_dtype)
        io = inp_out.astype(matmul_dtype)

        def gates(g):
            # gi = [input_in | input_out] @ w_ih[g]^T + b_ih[g], without concat:
            # split w_ih into its input_in / input_out halves.
            gi = (jnp.dot(ii, w_gi_in[g], preferred_element_type=f32)
                  + jnp.dot(io, w_gi_out[g], preferred_element_type=f32)
                  + b_gi[g])
            gh = jnp.dot(hm, w_gh[g], preferred_element_type=f32) + b_gh[g]
            return gi, gh

        gi_r, gh_r = gates(0)
        gi_i, gh_i = gates(1)
        gi_n, gh_n = gates(2)

        resetgate = jax.nn.sigmoid(gi_r + gh_r)
        inputgate = jax.nn.sigmoid(gi_i + gh_i)
        newgate = jnp.tanh(gi_n + resetgate * gh_n)
        return newgate + inputgate * (h - newgate)

    h = h_ref[...].astype(f32)                         # (M, H)
    if n_steps <= 4:                                   # short static trip count
        for _ in range(n_steps):
            h = one_step(h)
    else:
        h = jax.lax.fori_loop(0, n_steps, lambda i, x: one_step(x), h)

    out_ref[...] = h.astype(out_ref.dtype)


def _choose_batch_tile(batch, n_nodes, a_itemsize,
                       target_m=256, a_budget_bytes=4 << 20):
    """Largest divisor of `batch` whose A block fits the VMEM budget and whose
    folded GEMM M = bt*N stays near an MXU-friendly size."""
    best = 1
    for bt in range(1, batch + 1):
        if batch % bt:
            continue
        if 2 * bt * n_nodes * n_nodes * a_itemsize > a_budget_bytes:
            continue
        if bt * n_nodes > max(target_m, n_nodes):
            continue
        best = bt
    return best


@functools.partial(jax.jit, static_argnames=("step", "matmul_dtype"))
def gnn_forward(A, hidden, params, step=1, matmul_dtype=jnp.bfloat16):
    """Fused multi-step GNN forward.  A: (B, N, 2N) f32, hidden: (B, N, H) f32."""
    B, N, twoN = A.shape
    assert twoN == 2 * N
    H = hidden.shape[-1]
    md = jnp.dtype(matmul_dtype)
    f32 = jnp.float32

    # One-time weight prep (hoisted; torch (out,in) -> (in,out); per-gate and
    # per-half splits so the kernel never concats or slices sub-vreg lanes).
    w_ih, w_hh = params["w_ih"], params["w_hh"]               # (3H,2H), (3H,H)
    w_gi_in = jnp.stack([w_ih[g * H:(g + 1) * H, :H].T for g in range(3)]).astype(md)
    w_gi_out = jnp.stack([w_ih[g * H:(g + 1) * H, H:].T for g in range(3)]).astype(md)
    w_gh = jnp.stack([w_hh[g * H:(g + 1) * H, :].T for g in range(3)]).astype(md)
    b_gi = params["b_ih"].reshape(3, 1, H).astype(f32)
    b_gh = params["b_hh"].reshape(3, 1, H).astype(f32)
    w_ein = params["linear_edge_in_w"].T.astype(md)
    w_eout = params["linear_edge_out_w"].T.astype(md)
    b_ein = params["linear_edge_in_b"].reshape(1, H).astype(f32)
    b_eout = params["linear_edge_out_b"].reshape(1, H).astype(f32)
    b_iah = params["b_iah"].reshape(1, H).astype(f32)
    b_oah = params["b_oah"].reshape(1, H).astype(f32)

    # Pre-split adjacency into lane-clean halves; bf16 halves its HBM traffic.
    a_in = A[:, :, :N].astype(md)
    a_out = A[:, :, N:].astype(md)
    # Merge (B, N) -> M so all weight GEMMs see a dense M axis.
    h2d = hidden.reshape(B * N, H)

    bt = _choose_batch_tile(B, N, md.itemsize)
    grid = (B // bt,)

    # VMEM budgeting: double-buffered blocks + f32 step intermediates + weights.
    a_blk = 2 * bt * N * N * md.itemsize
    h_blk = bt * N * H * 4
    w_tot = 11 * H * H * md.itemsize + 16 * H * 4
    est = 2 * (a_blk + 2 * h_blk) + 12 * h_blk + w_tot
    vmem_limit = int(min(48 << 20, max(32 << 20, 4 * est)))

    def full(shape):
        return pl.BlockSpec(shape, lambda b: (0,) * len(shape))

    kernel = functools.partial(_gnn_kernel, bt=bt, n_nodes=N, hidden_size=H,
                               n_steps=step, matmul_dtype=md)

    out2d = pl.pallas_call(
        kernel,
        out_shape=jax.ShapeDtypeStruct((B * N, H), hidden.dtype),
        grid_spec=pltpu.PrefetchScalarGridSpec(
            num_scalar_prefetch=0,
            grid=grid,
            in_specs=[
                pl.BlockSpec((bt, N, N), lambda b: (b, 0, 0)),      # A_in
                pl.BlockSpec((bt, N, N), lambda b: (b, 0, 0)),      # A_out
                pl.BlockSpec((bt * N, H), lambda b: (b, 0)),        # hidden (M,H)
                full((H, H)), full((1, H)),                         # edge_in  W,b
                full((H, H)), full((1, H)),                         # edge_out W,b
                full((1, H)), full((1, H)),                         # b_iah, b_oah
                full((3, H, H)), full((3, H, H)), full((3, H, H)),  # w_ih_in/out, w_hh (per gate)
                full((3, 1, H)), full((3, 1, H)),                   # b_ih, b_hh (per gate)
            ],
            out_specs=pl.BlockSpec((bt * N, H), lambda b: (b, 0)),
        ),
        compiler_params=pltpu.CompilerParams(
            dimension_semantics=("parallel",),
            vmem_limit_bytes=vmem_limit),
    )(a_in, a_out, h2d,
      w_ein, b_ein, w_eout, b_eout, b_iah, b_oah,
      w_gi_in, w_gi_out, w_gh, b_gi, b_gh)

    return out2d.reshape(B, N, H)


def gnn_reference(A, hidden, params, step=1):
    """Pure-JAX reference mirroring the PyTorch module (for validation)."""
    N = A.shape[1]

    def cell(h):
        eh_in = h @ params["linear_edge_in_w"].T + params["linear_edge_in_b"]
        eh_out = h @ params["linear_edge_out_w"].T + params["linear_edge_out_b"]
        input_in = jnp.einsum('bij,bjh->bih', A[:, :, :N], eh_in) + params["b_iah"]
        input_out = jnp.einsum('bij,bjh->bih', A[:, :, N:], eh_out) + params["b_oah"]
        inputs = jnp.concatenate([input_in, input_out], axis=2)
        gi = inputs @ params["w_ih"].T + params["b_ih"]
        gh = h @ params["w_hh"].T + params["b_hh"]
        i_r, i_i, i_n = jnp.split(gi, 3, axis=2)
        h_r, h_i, h_n = jnp.split(gh, 3, axis=2)
        r = jax.nn.sigmoid(i_r + h_r)
        z = jax.nn.sigmoid(i_i + h_i)
        n = jnp.tanh(i_n + r * h_n)
        return n + z * (h - n)

    h = hidden
    for _ in range(step):
        h = cell(h)
    return h


def init_params(key, hidden_size):
    H = hidden_size
    stdv = 1.0 / (H ** 0.5)
    keys = jax.random.split(key, 10)
    u = lambda k, shape: jax.random.uniform(k, shape, jnp.float32, -stdv, stdv)
    return {
        "w_ih": u(keys[0], (3 * H, 2 * H)),
        "w_hh": u(keys[1], (3 * H, H)),
        "b_ih": u(keys[2], (3 * H,)),
        "b_hh": u(keys[3], (3 * H,)),
        "b_iah": u(keys[4], (H,)),
        "b_oah": u(keys[5], (H,)),
        "linear_edge_in_w": u(keys[6], (H, H)),
        "linear_edge_in_b": u(keys[7], (H,)),
        "linear_edge_out_w": u(keys[8], (H, H)),
        "linear_edge_out_b": u(keys[9], (H,)),
        # TODO(synk): linear_edge_f is defined in the PyTorch __init__ but never
        # used in forward(), so it is intentionally omitted here.
    }


if __name__ == "__main__":
    B, N, H, STEP = 2, 8, 32, 2
    key = jax.random.PRNGKey(0)
    k_a, k_h, k_p = jax.random.split(key, 3)

    A = jax.random.uniform(k_a, (B, N, 2 * N), jnp.float32)
    hidden = jax.random.normal(k_h, (B, N, H), jnp.float32)
    params = init_params(k_p, H)

    out = gnn_forward(A, hidden, params, step=STEP)
    out = jax.block_until_ready(out)
    assert out.shape == (B, N, H) and out.dtype == jnp.float32

    # Loose tolerance: kernel uses bf16 MXU operands with f32 accumulation.
    ref = gnn_reference(A, hidden, params, step=STEP)
    assert bool(jnp.all(jnp.isfinite(out)))
    assert bool(jnp.allclose(out, ref, rtol=0.1, atol=0.3)), \
        float(jnp.max(jnp.abs(out - ref)))

    print("KERNEL_OK")
</pallas_src>

<mosaic_0001>
module attributes {stable_mosaic.version = 11 : i64} {
  func.func @_gnn_kernel(%arg0: i32, %arg1: memref<2x8x8xbf16, #tpu.memory_space<vmem>>, %arg2: memref<2x8x8xbf16, #tpu.memory_space<vmem>>, %arg3: memref<16x32xf32, #tpu.memory_space<vmem>>, %arg4: memref<32x32xbf16, #tpu.memory_space<vmem>>, %arg5: memref<1x32xf32, #tpu.memory_space<vmem>>, %arg6: memref<32x32xbf16, #tpu.memory_space<vmem>>, %arg7: memref<1x32xf32, #tpu.memory_space<vmem>>, %arg8: memref<1x32xf32, #tpu.memory_space<vmem>>, %arg9: memref<1x32xf32, #tpu.memory_space<vmem>>, %arg10: memref<3x32x32xbf16, #tpu.memory_space<vmem>>, %arg11: memref<3x32x32xbf16, #tpu.memory_space<vmem>>, %arg12: memref<3x32x32xbf16, #tpu.memory_space<vmem>>, %arg13: memref<3x1x32xf32, #tpu.memory_space<vmem>>, %arg14: memref<3x1x32xf32, #tpu.memory_space<vmem>>, %arg15: memref<16x32xf32, #tpu.memory_space<vmem>>) attributes {dimension_semantics = [#tpu.dimension_semantics<parallel>], iteration_bounds = array<i64: 1>, scalar_prefetch = 0 : i64, scratch_operands = 0 : i64, tpu.core_type = #tpu.core_type<tc>, window_params = [{transform_indices = @transform_0, window_bounds = array<i64: 2, 8, 8>}, {transform_indices = @transform_1, window_bounds = array<i64: 2, 8, 8>}, {transform_indices = @transform_2, window_bounds = array<i64: 16, 32>}, {pipeline_mode = #tpu.pipeline_mode<synchronous>, transform_indices = @transform_3, window_bounds = array<i64: 32, 32>}, {pipeline_mode = #tpu.pipeline_mode<synchronous>, transform_indices = @transform_4, window_bounds = array<i64: 1, 32>}, {pipeline_mode = #tpu.pipeline_mode<synchronous>, transform_indices = @transform_5, window_bounds = array<i64: 32, 32>}, {pipeline_mode = #tpu.pipeline_mode<synchronous>, transform_indices = @transform_6, window_bounds = array<i64: 1, 32>}, {pipeline_mode = #tpu.pipeline_mode<synchronous>, transform_indices = @transform_7, window_bounds = array<i64: 1, 32>}, {pipeline_mode = #tpu.pipeline_mode<synchronous>, transform_indices = @transform_8, window_bounds = array<i64: 1, 32>}, {pipeline_mode = #tpu.pipeline_mode<synchronous>, transform_indices = @transform_9, window_bounds = array<i64: 3, 32, 32>}, {pipeline_mode = #tpu.pipeline_mode<synchronous>, transform_indices = @transform_10, window_bounds = array<i64: 3, 32, 32>}, {pipeline_mode = #tpu.pipeline_mode<synchronous>, transform_indices = @transform_11, window_bounds = array<i64: 3, 32, 32>}, {pipeline_mode = #tpu.pipeline_mode<synchronous>, transform_indices = @transform_12, window_bounds = array<i64: 3, 1, 32>}, {pipeline_mode = #tpu.pipeline_mode<synchronous>, transform_indices = @transform_13, window_bounds = array<i64: 3, 1, 32>}, {transform_indices = @transform_14, window_bounds = array<i64: 16, 32>}]} {
    %c0 = arith.constant 0 : index
    %c0_0 = arith.constant 0 : index
    %c0_1 = arith.constant 0 : index
    %0 = vector.load %arg1[%c0, %c0_0, %c0_1] : memref<2x8x8xbf16, #tpu.memory_space<vmem>>, vector<2x8x8xbf16>
    %c0_2 = arith.constant 0 : index
    %c0_3 = arith.constant 0 : index
    %c0_4 = arith.constant 0 : index
    %1 = vector.load %arg2[%c0_2, %c0_3, %c0_4] : memref<2x8x8xbf16, #tpu.memory_space<vmem>>, vector<2x8x8xbf16>
    %c0_5 = arith.constant 0 : index
    %c0_6 = arith.constant 0 : index
    %2 = vector.load %arg4[%c0_5, %c0_6] : memref<32x32xbf16, #tpu.memory_space<vmem>>, vector<32x32xbf16>
    %c0_7 = arith.constant 0 : index
    %c0_8 = arith.constant 0 : index
    %3 = vector.load %arg6[%c0_7, %c0_8] : memref<32x32xbf16, #tpu.memory_space<vmem>>, vector<32x32xbf16>
    %c0_9 = arith.constant 0 : index
    %c0_10 = arith.constant 0 : index
    %4 = vector.load %arg5[%c0_9, %c0_10] : memref<1x32xf32, #tpu.memory_space<vmem>>, vector<1x32xf32>
    %c0_11 = arith.constant 0 : index
    %c0_12 = arith.constant 0 : index
    %5 = vector.load %arg7[%c0_11, %c0_12] : memref<1x32xf32, #tpu.memory_space<vmem>>, vector<1x32xf32>
    %c0_13 = arith.constant 0 : index
    %c0_14 = arith.constant 0 : index
    %6 = vector.load %arg8[%c0_13, %c0_14] : memref<1x32xf32, #tpu.memory_space<vmem>>, vector<1x32xf32>
    %c0_15 = arith.constant 0 : index
    %c0_16 = arith.constant 0 : index
    %7 = vector.load %arg9[%c0_15, %c0_16] : memref<1x32xf32, #tpu.memory_space<vmem>>, vector<1x32xf32>
    %c0_17 = arith.constant 0 : index
    %c0_18 = arith.constant 0 : index
    %c0_19 = arith.constant 0 : index
    %8 = vector.load %arg10[%c0_17, %c0_18, %c0_19] : memref<3x32x32xbf16, #tpu.memory_space<vmem>>, vector<1x32x32xbf16>
    %9 = vector.shape_cast %8 : vector<1x32x32xbf16> to vector<32x32xbf16>
    %c1 = arith.constant 1 : index
    %c0_20 = arith.constant 0 : index
    %c0_21 = arith.constant 0 : index
    %10 = vector.load %arg10[%c1, %c0_20, %c0_21] : memref<3x32x32xbf16, #tpu.memory_space<vmem>>, vector<1x32x32xbf16>
    %11 = vector.shape_cast %10 : vector<1x32x32xbf16> to vector<32x32xbf16>
    %c2 = arith.constant 2 : index
    %c0_22 = arith.constant 0 : index
    %c0_23 = arith.constant 0 : index
    %12 = vector.load %arg10[%c2, %c0_22, %c0_23] : memref<3x32x32xbf16, #tpu.memory_space<vmem>>, vector<1x32x32xbf16>
    %13 = vector.shape_cast %12 : vector<1x32x32xbf16> to vector<32x32xbf16>
    %c0_24 = arith.constant 0 : index
    %c0_25 = arith.constant 0 : index
    %c0_26 = arith.constant 0 : index
    %14 = vector.load %arg11[%c0_24, %c0_25, %c0_26] : memref<3x32x32xbf16, #tpu.memory_space<vmem>>, vector<1x32x32xbf16>
    %15 = vector.shape_cast %14 : vector<1x32x32xbf16> to vector<32x32xbf16>
    %c1_27 = arith.constant 1 : index
    %c0_28 = arith.constant 0 : index
    %c0_29 = arith.constant 0 : index
    %16 = vector.load %arg11[%c1_27, %c0_28, %c0_29] : memref<3x32x32xbf16, #tpu.memory_space<vmem>>, vector<1x32x32xbf16>
    %17 = vector.shape_cast %16 : vector<1x32x32xbf16> to vector<32x32xbf16>
    %c2_30 = arith.constant 2 : index
    %c0_31 = arith.constant 0 : index
    %c0_32 = arith.constant 0 : index
    %18 = vector.load %arg11[%c2_30, %c0_31, %c0_32] : memref<3x32x32xbf16, #tpu.memory_space<vmem>>, vector<1x32x32xbf16>
    %19 = vector.shape_cast %18 : vector<1x32x32xbf16> to vector<32x32xbf16>
    %c0_33 = arith.constant 0 : index
    %c0_34 = arith.constant 0 : index
    %c0_35 = arith.constant 0 : index
    %20 = vector.load %arg12[%c0_33, %c0_34, %c0_35] : memref<3x32x32xbf16, #tpu.memory_space<vmem>>, vector<1x32x32xbf16>
    %21 = vector.shape_cast %20 : vector<1x32x32xbf16> to vector<32x32xbf16>
    %c1_36 = arith.constant 1 : index
    %c0_37 = arith.constant 0 : index
    %c0_38 = arith.constant 0 : index
    %22 = vector.load %arg12[%c1_36, %c0_37, %c0_38] : memref<3x32x32xbf16, #tpu.memory_space<vmem>>, vector<1x32x32xbf16>
    %23 = vector.shape_cast %22 : vector<1x32x32xbf16> to vector<32x32xbf16>
    %c2_39 = arith.constant 2 : index
    %c0_40 = arith.constant 0 : index
    %c0_41 = arith.constant 0 : index
    %24 = vector.load %arg12[%c2_39, %c0_40, %c0_41] : memref<3x32x32xbf16, #tpu.memory_space<vmem>>, vector<1x32x32xbf16>
    %25 = vector.shape_cast %24 : vector<1x32x32xbf16> to vector<32x32xbf16>
    %c0_42 = arith.constant 0 : index
    %c0_43 = arith.constant 0 : index
    %c0_44 = arith.constant 0 : index
    %26 = vector.load %arg13[%c0_42, %c0_43, %c0_44] : memref<3x1x32xf32, #tpu.memory_space<vmem>>, vector<1x1x32xf32>
    %27 = vector.shape_cast %26 : vector<1x1x32xf32> to vector<1x32xf32>
    %c1_45 = arith.constant 1 : index
    %c0_46 = arith.constant 0 : index
    %c0_47 = arith.constant 0 : index
    %28 = vector.load %arg13[%c1_45, %c0_46, %c0_47] : memref<3x1x32xf32, #tpu.memory_space<vmem>>, vector<1x1x32xf32>
    %29 = vector.shape_cast %28 : vector<1x1x32xf32> to vector<1x32xf32>
    %c2_48 = arith.constant 2 : index
    %c0_49 = arith.constant 0 : index
    %c0_50 = arith.constant 0 : index
    %30 = vector.load %arg13[%c2_48, %c0_49, %c0_50] : memref<3x1x32xf32, #tpu.memory_space<vmem>>, vector<1x1x32xf32>
    %31 = vector.shape_cast %30 : vector<1x1x32xf32> to vector<1x32xf32>
    %c0_51 = arith.constant 0 : index
    %c0_52 = arith.constant 0 : index
    %c0_53 = arith.constant 0 : index
    %32 = vector.load %arg14[%c0_51, %c0_52, %c0_53] : memref<3x1x32xf32, #tpu.memory_space<vmem>>, vector<1x1x32xf32>
    %33 = vector.shape_cast %32 : vector<1x1x32xf32> to vector<1x32xf32>
    %c1_54 = arith.constant 1 : index
    %c0_55 = arith.constant 0 : index
    %c0_56 = arith.constant 0 : index
    %34 = vector.load %arg14[%c1_54, %c0_55, %c0_56] : memref<3x1x32xf32, #tpu.memory_space<vmem>>, vector<1x1x32xf32>
    %35 = vector.shape_cast %34 : vector<1x1x32xf32> to vector<1x32xf32>
    %c2_57 = arith.constant 2 : index
    %c0_58 = arith.constant 0 : index
    %c0_59 = arith.constant 0 : index
    %36 = vector.load %arg14[%c2_57, %c0_58, %c0_59] : memref<3x1x32xf32, #tpu.memory_space<vmem>>, vector<1x1x32xf32>
    %37 = vector.shape_cast %36 : vector<1x1x32xf32> to vector<1x32xf32>
    %c0_60 = arith.constant 0 : index
    %c0_61 = arith.constant 0 : index
    %38 = vector.load %arg3[%c0_60, %c0_61] : memref<16x32xf32, #tpu.memory_space<vmem>>, vector<16x32xf32>
    %39 = arith.truncf %38 : vector<16x32xf32> to vector<16x32xbf16>
    %cst = arith.constant dense<0.000000e+00> : vector<16x32xf32>
    %40 = tpu.matmul %39, %2, %cst {dimension_numbers = #tpu.dot_dimension_numbers<[1], [0], [0], [1], [0, 0, 1, 1], [], []>} : vector<16x32xbf16>, vector<32x32xbf16>, vector<16x32xf32> -> vector<16x32xf32>
    %41 = vector.broadcast %4 : vector<1x32xf32> to vector<16x32xf32>
    %42 = arith.addf %40, %41 : vector<16x32xf32>
    %cst_62 = arith.constant dense<0.000000e+00> : vector<16x32xf32>
    %43 = tpu.matmul %39, %3, %cst_62 {dimension_numbers = #tpu.dot_dimension_numbers<[1], [0], [0], [1], [0, 0, 1, 1], [], []>} : vector<16x32xbf16>, vector<32x32xbf16>, vector<16x32xf32> -> vector<16x32xf32>
    %44 = vector.broadcast %5 : vector<1x32xf32> to vector<16x32xf32>
    %45 = arith.addf %43, %44 : vector<16x32xf32>
    %46 = arith.truncf %42 : vector<16x32xf32> to vector<16x32xbf16>
    %47 = vector.shape_cast %46 : vector<16x32xbf16> to vector<2x8x32xbf16>
    %48 = arith.truncf %45 : vector<16x32xf32> to vector<16x32xbf16>
    %49 = vector.shape_cast %48 : vector<16x32xbf16> to vector<2x8x32xbf16>
    "tpu.trace_start"() <{level = 10 : i32, message = "bij,bjh->bih"}> : () -> ()
    %cst_63 = arith.constant dense<0.000000e+00> : vector<2x8x32xf32>
    %50 = tpu.matmul %0, %47, %cst_63 {dimension_numbers = #tpu.dot_dimension_numbers<[2], [1], [1], [2], [0, 0, 0, 1, 1, 2], [0], [0]>} : vector<2x8x8xbf16>, vector<2x8x32xbf16>, vector<2x8x32xf32> -> vector<2x8x32xf32>
    "tpu.trace_stop"() : () -> ()
    %51 = vector.shape_cast %50 : vector<2x8x32xf32> to vector<16x32xf32>
    %52 = vector.broadcast %6 : vector<1x32xf32> to vector<16x32xf32>
    %53 = arith.addf %51, %52 : vector<16x32xf32>
    "tpu.trace_start"() <{level = 10 : i32, message = "bij,bjh->bih"}> : () -> ()
    %cst_64 = arith.constant dense<0.000000e+00> : vector<2x8x32xf32>
    %54 = tpu.matmul %1, %49, %cst_64 {dimension_numbers = #tpu.dot_dimension_numbers<[2], [1], [1], [2], [0, 0, 0, 1, 1, 2], [0], [0]>} : vector<2x8x8xbf16>, vector<2x8x32xbf16>, vector<2x8x32xf32> -> vector<2x8x32xf32>
    "tpu.trace_stop"() : () -> ()
    %55 = vector.shape_cast %54 : vector<2x8x32xf32> to vector<16x32xf32>
    %56 = vector.broadcast %7 : vector<1x32xf32> to vector<16x32xf32>
    %57 = arith.addf %55, %56 : vector<16x32xf32>
    %58 = arith.truncf %53 : vector<16x32xf32> to vector<16x32xbf16>
    %59 = arith.truncf %57 : vector<16x32xf32> to vector<16x32xbf16>
    %cst_65 = arith.constant dense<0.000000e+00> : vector<16x32xf32>
    %60 = tpu.matmul %58, %9, %cst_65 {dimension_numbers = #tpu.dot_dimension_numbers<[1], [0], [0], [1], [0, 0, 1, 1], [], []>} : vector<16x32xbf16>, vector<32x32xbf16>, vector<16x32xf32> -> vector<16x32xf32>
    %cst_66 = arith.constant dense<0.000000e+00> : vector<16x32xf32>
    %61 = tpu.matmul %59, %15, %cst_66 {dimension_numbers = #tpu.dot_dimension_numbers<[1], [0], [0], [1], [0, 0, 1, 1], [], []>} : vector<16x32xbf16>, vector<32x32xbf16>, vector<16x32xf32> -> vector<16x32xf32>
    %62 = arith.addf %60, %61 : vector<16x32xf32>
    %63 = vector.broadcast %27 : vector<1x32xf32> to vector<16x32xf32>
    %64 = arith.addf %62, %63 : vector<16x32xf32>
    %cst_67 = arith.constant dense<0.000000e+00> : vector<16x32xf32>
    %65 = tpu.matmul %39, %21, %cst_67 {dimension_numbers = #tpu.dot_dimension_numbers<[1], [0], [0], [1], [0, 0, 1, 1], [], []>} : vector<16x32xbf16>, vector<32x32xbf16>, vector<16x32xf32> -> vector<16x32xf32>
    %66 = vector.broadcast %33 : vector<1x32xf32> to vector<16x32xf32>
    %67 = arith.addf %65, %66 : vector<16x32xf32>
    %cst_68 = arith.constant dense<0.000000e+00> : vector<16x32xf32>
    %68 = tpu.matmul %58, %11, %cst_68 {dimension_numbers = #tpu.dot_dimension_numbers<[1], [0], [0], [1], [0, 0, 1, 1], [], []>} : vector<16x32xbf16>, vector<32x32xbf16>, vector<16x32xf32> -> vector<16x32xf32>
    %cst_69 = arith.constant dense<0.000000e+00> : vector<16x32xf32>
    %69 = tpu.matmul %59, %17, %cst_69 {dimension_numbers = #tpu.dot_dimension_numbers<[1], [0], [0], [1], [0, 0, 1, 1], [], []>} : vector<16x32xbf16>, vector<32x32xbf16>, vector<16x32xf32> -> vector<16x32xf32>
    %70 = arith.addf %68, %69 : vector<16x32xf32>
    %71 = vector.broadcast %29 : vector<1x32xf32> to vector<16x32xf32>
    %72 = arith.addf %70, %71 : vector<16x32xf32>
    %cst_70 = arith.constant dense<0.000000e+00> : vector<16x32xf32>
    %73 = tpu.matmul %39, %23, %cst_70 {dimension_numbers = #tpu.dot_dimension_numbers<[1], [0], [0], [1], [0, 0, 1, 1], [], []>} : vector<16x32xbf16>, vector<32x32xbf16>, vector<16x32xf32> -> vector<16x32xf32>
    %74 = vector.broadcast %35 : vector<1x32xf32> to vector<16x32xf32>
    %75 = arith.addf %73, %74 : vector<16x32xf32>
    %cst_71 = arith.constant dense<0.000000e+00> : vector<16x32xf32>
    %76 = tpu.matmul %58, %13, %cst_71 {dimension_numbers = #tpu.dot_dimension_numbers<[1], [0], [0], [1], [0, 0, 1, 1], [], []>} : vector<16x32xbf16>, vector<32x32xbf16>, vector<16x32xf32> -> vector<16x32xf32>
    %cst_72 = arith.constant dense<0.000000e+00> : vector<16x32xf32>
    %77 = tpu.matmul %59, %19, %cst_72 {dimension_numbers = #tpu.dot_dimension_numbers<[1], [0], [0], [1], [0, 0, 1, 1], [], []>} : vector<16x32xbf16>, vector<32x32xbf16>, vector<16x32xf32> -> vector<16x32xf32>
    %78 = arith.addf %76, %77 : vector<16x32xf32>
    %79 = vector.broadcast %31 : vector<1x32xf32> to vector<16x32xf32>
    %80 = arith.addf %78, %79 : vector<16x32xf32>
    %cst_73 = arith.constant dense<0.000000e+00> : vector<16x32xf32>
    %81 = tpu.matmul %39, %25, %cst_73 {dimension_numbers = #tpu.dot_dimension_numbers<[1], [0], [0], [1], [0, 0, 1, 1], [], []>} : vector<16x32xbf16>, vector<32x32xbf16>, vector<16x32xf32> -> vector<16x32xf32>
    %82 = vector.broadcast %37 : vector<1x32xf32> to vector<16x32xf32>
    %83 = arith.addf %81, %82 : vector<16x32xf32>
    %84 = arith.addf %64, %67 : vector<16x32xf32>
    %85 = arith.negf %84 : vector<16x32xf32>
    %86 = math.exp %85 : vector<16x32xf32>
    %cst_74 = arith.constant 1.000000e+00 : f32
    %87 = vector.broadcast %cst_74 : f32 to vector<16x32xf32>
    %88 = arith.addf %87, %86 : vector<16x32xf32>
    %89 = arith.divf %87, %88 : vector<16x32xf32>
    %90 = arith.addf %72, %75 : vector<16x32xf32>
    %91 = arith.negf %90 : vector<16x32xf32>
    %92 = math.exp %91 : vector<16x32xf32>
    %cst_75 = arith.constant 1.000000e+00 : f32
    %93 = vector.broadcast %cst_75 : f32 to vector<16x32xf32>
    %94 = arith.addf %93, %92 : vector<16x32xf32>
    %95 = arith.divf %93, %94 : vector<16x32xf32>
    %96 = arith.mulf %89, %83 : vector<16x32xf32>
    %97 = arith.addf %80, %96 : vector<16x32xf32>
    %98 = math.tanh %97 : vector<16x32xf32>
    %99 = arith.subf %38, %98 : vector<16x32xf32>
    %100 = arith.mulf %95, %99 : vector<16x32xf32>
    %101 = arith.addf %98, %100 : vector<16x32xf32>
    %102 = arith.truncf %101 : vector<16x32xf32> to vector<16x32xbf16>
    %cst_76 = arith.constant dense<0.000000e+00> : vector<16x32xf32>
    %103 = tpu.matmul %102, %2, %cst_76 {dimension_numbers = #tpu.dot_dimension_numbers<[1], [0], [0], [1], [0, 0, 1, 1], [], []>} : vector<16x32xbf16>, vector<32x32xbf16>, vector<16x32xf32> -> vector<16x32xf32>
    %104 = vector.broadcast %4 : vector<1x32xf32> to vector<16x32xf32>
    %105 = arith.addf %103, %104 : vector<16x32xf32>
    %cst_77 = arith.constant dense<0.000000e+00> : vector<16x32xf32>
    %106 = tpu.matmul %102, %3, %cst_77 {dimension_numbers = #tpu.dot_dimension_numbers<[1], [0], [0], [1], [0, 0, 1, 1], [], []>} : vector<16x32xbf16>, vector<32x32xbf16>, vector<16x32xf32> -> vector<16x32xf32>
    %107 = vector.broadcast %5 : vector<1x32xf32> to vector<16x32xf32>
    %108 = arith.addf %106, %107 : vector<16x32xf32>
    %109 = arith.truncf %105 : vector<16x32xf32> to vector<16x32xbf16>
    %110 = vector.shape_cast %109 : vector<16x32xbf16> to vector<2x8x32xbf16>
    %111 = arith.truncf %108 : vector<16x32xf32> to vector<16x32xbf16>
    %112 = vector.shape_cast %111 : vector<16x32xbf16> to vector<2x8x32xbf16>
    "tpu.trace_start"() <{level = 10 : i32, message = "bij,bjh->bih"}> : () -> ()
    %cst_78 = arith.constant dense<0.000000e+00> : vector<2x8x32xf32>
    %113 = tpu.matmul %0, %110, %cst_78 {dimension_numbers = #tpu.dot_dimension_numbers<[2], [1], [1], [2], [0, 0, 0, 1, 1, 2], [0], [0]>} : vector<2x8x8xbf16>, vector<2x8x32xbf16>, vector<2x8x32xf32> -> vector<2x8x32xf32>
    "tpu.trace_stop"() : () -> ()
    %114 = vector.shape_cast %113 : vector<2x8x32xf32> to vector<16x32xf32>
    %115 = vector.broadcast %6 : vector<1x32xf32> to vector<16x32xf32>
    %116 = arith.addf %114, %115 : vector<16x32xf32>
    "tpu.trace_start"() <{level = 10 : i32, message = "bij,bjh->bih"}> : () -> ()
    %cst_79 = arith.constant dense<0.000000e+00> : vector<2x8x32xf32>
    %117 = tpu.matmul %1, %112, %cst_79 {dimension_numbers = #tpu.dot_dimension_numbers<[2], [1], [1], [2], [0, 0, 0, 1, 1, 2], [0], [0]>} : vector<2x8x8xbf16>, vector<2x8x32xbf16>, vector<2x8x32xf32> -> vector<2x8x32xf32>
    "tpu.trace_stop"() : () -> ()
    %118 = vector.shape_cast %117 : vector<2x8x32xf32> to vector<16x32xf32>
    %119 = vector.broadcast %7 : vector<1x32xf32> to vector<16x32xf32>
    %120 = arith.addf %118, %119 : vector<16x32xf32>
    %121 = arith.truncf %116 : vector<16x32xf32> to vector<16x32xbf16>
    %122 = arith.truncf %120 : vector<16x32xf32> to vector<16x32xbf16>
    %cst_80 = arith.constant dense<0.000000e+00> : vector<16x32xf32>
    %123 = tpu.matmul %121, %9, %cst_80 {dimension_numbers = #tpu.dot_dimension_numbers<[1], [0], [0], [1], [0, 0, 1, 1], [], []>} : vector<16x32xbf16>, vector<32x32xbf16>, vector<16x32xf32> -> vector<16x32xf32>
    %cst_81 = arith.constant dense<0.000000e+00> : vector<16x32xf32>
    %124 = tpu.matmul %122, %15, %cst_81 {dimension_numbers = #tpu.dot_dimension_numbers<[1], [0], [0], [1], [0, 0, 1, 1], [], []>} : vector<16x32xbf16>, vector<32x32xbf16>, vector<16x32xf32> -> vector<16x32xf32>
    %125 = arith.addf %123, %124 : vector<16x32xf32>
    %126 = vector.broadcast %27 : vector<1x32xf32> to vector<16x32xf32>
    %127 = arith.addf %125, %126 : vector<16x32xf32>
    %cst_82 = arith.constant dense<0.000000e+00> : vector<16x32xf32>
    %128 = tpu.matmul %102, %21, %cst_82 {dimension_numbers = #tpu.dot_dimension_numbers<[1], [0], [0], [1], [0, 0, 1, 1], [], []>} : vector<16x32xbf16>, vector<32x32xbf16>, vector<16x32xf32> -> vector<16x32xf32>
    %129 = vector.broadcast %33 : vector<1x32xf32> to vector<16x32xf32>
    %130 = arith.addf %128, %129 : vector<16x32xf32>
    %cst_83 = arith.constant dense<0.000000e+00> : vector<16x32xf32>
    %131 = tpu.matmul %121, %11, %cst_83 {dimension_numbers = #tpu.dot_dimension_numbers<[1], [0], [0], [1], [0, 0, 1, 1], [], []>} : vector<16x32xbf16>, vector<32x32xbf16>, vector<16x32xf32> -> vector<16x32xf32>
    %cst_84 = arith.constant dense<0.000000e+00> : vector<16x32xf32>
    %132 = tpu.matmul %122, %17, %cst_84 {dimension_numbers = #tpu.dot_dimension_numbers<[1], [0], [0], [1], [0, 0, 1, 1], [], []>} : vector<16x32xbf16>, vector<32x32xbf16>, vector<16x32xf32> -> vector<16x32xf32>
    %133 = arith.addf %131, %132 : vector<16x32xf32>
    %134 = vector.broadcast %29 : vector<1x32xf32> to vector<16x32xf32>
    %135 = arith.addf %133, %134 : vector<16x32xf32>
    %cst_85 = arith.constant dense<0.000000e+00> : vector<16x32xf32>
    %136 = tpu.matmul %102, %23, %cst_85 {dimension_numbers = #tpu.dot_dimension_numbers<[1], [0], [0], [1], [0, 0, 1, 1], [], []>} : vector<16x32xbf16>, vector<32x32xbf16>, vector<16x32xf32> -> vector<16x32xf32>
    %137 = vector.broadcast %35 : vector<1x32xf32> to vector<16x32xf32>
    %138 = arith.addf %136, %137 : vector<16x32xf32>
    %cst_86 = arith.constant dense<0.000000e+00> : vector<16x32xf32>
    %139 = tpu.matmul %121, %13, %cst_86 {dimension_numbers = #tpu.dot_dimension_numbers<[1], [0], [0], [1], [0, 0, 1, 1], [], []>} : vector<16x32xbf16>, vector<32x32xbf16>, vector<16x32xf32> -> vector<16x32xf32>
    %cst_87 = arith.constant dense<0.000000e+00> : vector<16x32xf32>
    %140 = tpu.matmul %122, %19, %cst_87 {dimension_numbers = #tpu.dot_dimension_numbers<[1], [0], [0], [1], [0, 0, 1, 1], [], []>} : vector<16x32xbf16>, vector<32x32xbf16>, vector<16x32xf32> -> vector<16x32xf32>
    %141 = arith.addf %139, %140 : vector<16x32xf32>
    %142 = vector.broadcast %31 : vector<1x32xf32> to vector<16x32xf32>
    %143 = arith.addf %141, %142 : vector<16x32xf32>
    %cst_88 = arith.constant dense<0.000000e+00> : vector<16x32xf32>
    %144 = tpu.matmul %102, %25, %cst_88 {dimension_numbers = #tpu.dot_dimension_numbers<[1], [0], [0], [1], [0, 0, 1, 1], [], []>} : vector<16x32xbf16>, vector<32x32xbf16>, vector<16x32xf32> -> vector<16x32xf32>
    %145 = vector.broadcast %37 : vector<1x32xf32> to vector<16x32xf32>
    %146 = arith.addf %144, %145 : vector<16x32xf32>
    %147 = arith.addf %127, %130 : vector<16x32xf32>
    %148 = arith.negf %147 : vector<16x32xf32>
    %149 = math.exp %148 : vector<16x32xf32>
    %cst_89 = arith.constant 1.000000e+00 : f32
    %150 = vector.broadcast %cst_89 : f32 to vector<16x32xf32>
    %151 = arith.addf %150, %149 : vector<16x32xf32>
    %152 = arith.divf %150, %151 : vector<16x32xf32>
    %153 = arith.addf %135, %138 : vector<16x32xf32>
    %154 = arith.negf %153 : vector<16x32xf32>
    %155 = math.exp %154 : vector<16x32xf32>
    %cst_90 = arith.constant 1.000000e+00 : f32
    %156 = vector.broadcast %cst_90 : f32 to vector<16x32xf32>
    %157 = arith.addf %156, %155 : vector<16x32xf32>
    %158 = arith.divf %156, %157 : vector<16x32xf32>
    %159 = arith.mulf %152, %146 : vector<16x32xf32>
    %160 = arith.addf %143, %159 : vector<16x32xf32>
    %161 = math.tanh %160 : vector<16x32xf32>
    %162 = arith.subf %101, %161 : vector<16x32xf32>
    %163 = arith.mulf %158, %162 : vector<16x32xf32>
    %164 = arith.addf %161, %163 : vector<16x32xf32>
    %c0_91 = arith.constant 0 : index
    %c0_92 = arith.constant 0 : index
    %165 = vector.load %arg15[%c0_91, %c0_92] : memref<16x32xf32, #tpu.memory_space<vmem>>, vector<16x32xf32>
    tpu.vector_store %arg15[%c0_91, %c0_92], %164 {strides = array<i32>} : memref<16x32xf32, #tpu.memory_space<vmem>>, vector<16x32xf32>,
    return
  }
  func.func @transform_0(%arg0: i32) -> (i32, i32, i32) {
    %c0_i32 = arith.constant 0 : i32
    %c0_i32_0 = arith.constant 0 : i32
    %c0_i32_1 = arith.constant 0 : i32
    return %arg0, %c0_i32, %c0_i32_0 : i32, i32, i32
  }
  func.func @transform_1(%arg0: i32) -> (i32, i32, i32) {
    %c0_i32 = arith.constant 0 : i32
    %c0_i32_0 = arith.constant 0 : i32
    %c0_i32_1 = arith.constant 0 : i32
    return %arg0, %c0_i32, %c0_i32_0 : i32, i32, i32
  }
  func.func @transform_2(%arg0: i32) -> (i32, i32) {
    %c0_i32 = arith.constant 0 : i32
    %c0_i32_0 = arith.constant 0 : i32
    return %arg0, %c0_i32 : i32, i32
  }
  func.func @transform_3(%arg0: i32) -> (i32, i32) {
    %c0_i32 = arith.constant 0 : i32
    %c0_i32_0 = arith.constant 0 : i32
    %c0_i32_1 = arith.constant 0 : i32
    return %c0_i32, %c0_i32_0 : i32, i32
  }
  func.func @transform_4(%arg0: i32) -> (i32, i32) {
    %c0_i32 = arith.constant 0 : i32
    %c0_i32_0 = arith.constant 0 : i32
    %c0_i32_1 = arith.constant 0 : i32
    return %c0_i32, %c0_i32_0 : i32, i32
  }
  func.func @transform_5(%arg0: i32) -> (i32, i32) {
    %c0_i32 = arith.constant 0 : i32
    %c0_i32_0 = arith.constant 0 : i32
    %c0_i32_1 = arith.constant 0 : i32
    return %c0_i32, %c0_i32_0 : i32, i32
  }
  func.func @transform_6(%arg0: i32) -> (i32, i32) {
    %c0_i32 = arith.constant 0 : i32
    %c0_i32_0 = arith.constant 0 : i32
    %c0_i32_1 = arith.constant 0 : i32
    return %c0_i32, %c0_i32_0 : i32, i32
  }
  func.func @transform_7(%arg0: i32) -> (i32, i32) {
    %c0_i32 = arith.constant 0 : i32
    %c0_i32_0 = arith.constant 0 : i32
    %c0_i32_1 = arith.constant 0 : i32
    return %c0_i32, %c0_i32_0 : i32, i32
  }
  func.func @transform_8(%arg0: i32) -> (i32, i32) {
    %c0_i32 = arith.constant 0 : i32
    %c0_i32_0 = arith.constant 0 : i32
    %c0_i32_1 = arith.constant 0 : i32
    return %c0_i32, %c0_i32_0 : i32, i32
  }
  func.func @transform_9(%arg0: i32) -> (i32, i32, i32) {
    %c0_i32 = arith.constant 0 : i32
    %c0_i32_0 = arith.constant 0 : i32
    %c0_i32_1 = arith.constant 0 : i32
    %c0_i32_2 = arith.constant 0 : i32
    return %c0_i32, %c0_i32_0, %c0_i32_1 : i32, i32, i32
  }
  func.func @transform_10(%arg0: i32) -> (i32, i32, i32) {
    %c0_i32 = arith.constant 0 : i32
    %c0_i32_0 = arith.constant 0 : i32
    %c0_i32_1 = arith.constant 0 : i32
    %c0_i32_2 = arith.constant 0 : i32
    return %c0_i32, %c0_i32_0, %c0_i32_1 : i32, i32, i32
  }
  func.func @transform_11(%arg0: i32) -> (i32, i32, i32) {
    %c0_i32 = arith.constant 0 : i32
    %c0_i32_0 = arith.constant 0 : i32
    %c0_i32_1 = arith.constant 0 : i32
    %c0_i32_2 = arith.constant 0 : i32
    return %c0_i32, %c0_i32_0, %c0_i32_1 : i32, i32, i32
  }
  func.func @transform_12(%arg0: i32) -> (i32, i32, i32) {
    %c0_i32 = arith.constant 0 : i32
    %c0_i32_0 = arith.constant 0 : i32
    %c0_i32_1 = arith.constant 0 : i32
    %c0_i32_2 = arith.constant 0 : i32
    return %c0_i32, %c0_i32_0, %c0_i32_1 : i32, i32, i32
  }
  func.func @transform_13(%arg0: i32) -> (i32, i32, i32) {
    %c0_i32 = arith.constant 0 : i32
    %c0_i32_0 = arith.constant 0 : i32
    %c0_i32_1 = arith.constant 0 : i32
    %c0_i32_2 = arith.constant 0 : i32
    return %c0_i32, %c0_i32_0, %c0_i32_1 : i32, i32, i32
  }
  func.func @transform_14(%arg0: i32) -> (i32, i32) {
    %c0_i32 = arith.constant 0 : i32
    %c0_i32_0 = arith.constant 0 : i32
    return %arg0, %c0_i32 : i32, i32
  }
}

</mosaic_0001>

<llo_original>
// kernel: gnn_forward.1
$region0: #{gnn_forward.1}
  #allocation0 [shape = 'u32[]', space=smem, size = 0x4, offset = 0x4, fixed_abs, tag = 'smem constant byte address 0x4 - core index']
  #allocation1 [shape = 'u32[144,128]{1,0:T(1,128)}', space=vmem, size = 0x12000, scoped, tag = 'internal scratch']
  %s0 = inlined_call_operand.vmem [shape: bf16[2,8,8], index: 0, kind: input, shape index: {}]
  %s1 = inlined_call_operand.vmem [shape: bf16[2,8,8], index: 1, kind: input, shape index: {}]
  %s2 = inlined_call_operand.vmem [shape: f32[16,32], index: 2, kind: input, shape index: {}]
  %s3 = inlined_call_operand.vmem [shape: bf16[32,32], index: 3, kind: input, shape index: {}]
  %s4 = inlined_call_operand.vmem [shape: f32[1,32], index: 4, kind: input, shape index: {}]
  %s5 = inlined_call_operand.vmem [shape: bf16[32,32], index: 5, kind: input, shape index: {}]
  %s6 = inlined_call_operand.vmem [shape: f32[1,32], index: 6, kind: input, shape index: {}]
  %s7 = inlined_call_operand.vmem [shape: f32[1,32], index: 7, kind: input, shape index: {}]
  %s8 = inlined_call_operand.vmem [shape: f32[1,32], index: 8, kind: input, shape index: {}]
  %s9 = inlined_call_operand.vmem [shape: bf16[3,32,32], index: 9, kind: input, shape index: {}]
  %s10 = inlined_call_operand.vmem [shape: bf16[3,32,32], index: 10, kind: input, shape index: {}]
  %s11 = inlined_call_operand.vmem [shape: bf16[3,32,32], index: 11, kind: input, shape index: {}]
  %s12 = inlined_call_operand.vmem [shape: f32[3,1,32], index: 12, kind: input, shape index: {}]
  %s13 = inlined_call_operand.vmem [shape: f32[3,1,32], index: 13, kind: input, shape index: {}]
  %s14 = inlined_call_operand.hbm [shape: f32[16,32], index: 14, kind: output, shape index: {}]
  %s15 = sld [smem:[#allocation0]]
  $region66: #{gnn_forward.1} parent=0
    _
  %s17 = ssub.s32 1, %s15
  %s18 = scalar_select 0, %s17, %s15
  $region1: #{gnn_forward.1} parent=0
    #allocation2 [shape = 'u8[8192]{0}', space=vmem, size = 0x2000, scoped, tag = 'output window, operand 0, single buffered']
    #allocation3 [shape = 's32[1]{0}', space=sflag, size = 0x4, scoped, tag = 'scoped memory for gnn_forward.1']
    %19 = vsyncpa [#allocation3], 0
    // Predicated region
    $region2: #{gnn_forward.1} parent=1 // pred_check
      _
    $region3: #{gnn_forward.1} parent=1 // pred_check_branch
      %21 = sbr.rel (0) target = $region5
    $region4: #{gnn_forward.1} parent=1 // pred_region
      _
    $region5: #{gnn_forward.1} parent=1 // pred_fallthru
      _
    // Predicated region
    $region6: #{gnn_forward.1} parent=1 // pred_check
      _
    $region7: #{gnn_forward.1} parent=1 // pred_check_branch
      %23 = sbr.rel (0) target = $region9
    $region8: #{gnn_forward.1} parent=1 // pred_region
      _
    $region9: #{gnn_forward.1} parent=1 // pred_fallthru
      _
    // Predicated region
    $region10: #{gnn_forward.1} parent=1 // pred_check
      _
    $region11: #{gnn_forward.1} parent=1 // pred_check_branch
      %25 = sbr.rel (0) target = $region13
    $region12: #{gnn_forward.1} parent=1 // pred_region
      _
    $region13: #{gnn_forward.1} parent=1 // pred_fallthru
      _
    // Predicated region
    $region14: #{gnn_forward.1} parent=1 // pred_check
      _
    $region15: #{gnn_forward.1} parent=1 // pred_check_branch
      %27 = sbr.rel (0) target = $region17
    $region16: #{gnn_forward.1} parent=1 // pred_region
      _
    $region17: #{gnn_forward.1} parent=1 // pred_fallthru
      _
    // Predicated region
    $region18: #{gnn_forward.1} parent=1 // pred_check
      _
    $region19: #{gnn_forward.1} parent=1 // pred_check_branch
      %29 = sbr.rel (0) target = $region21
    $region20: #{gnn_forward.1} parent=1 // pred_region
      _
    $region21: #{gnn_forward.1} parent=1 // pred_fallthru
      _
    // Predicated region
    $region22: #{gnn_forward.1} parent=1 // pred_check
      _
    $region23: #{gnn_forward.1} parent=1 // pred_check_branch
      %31 = sbr.rel (0) target = $region25
    $region24: #{gnn_forward.1} parent=1 // pred_region
      _
    $region25: #{gnn_forward.1} parent=1 // pred_fallthru
      _
    // Predicated region
    $region26: #{gnn_forward.1} parent=1 // pred_check
      _
    $region27: #{gnn_forward.1} parent=1 // pred_check_branch
      %33 = sbr.rel (0) target = $region29
    $region28: #{gnn_forward.1} parent=1 // pred_region
      _
    $region29: #{gnn_forward.1} parent=1 // pred_fallthru
      _
    // Predicated region
    $region30: #{gnn_forward.1} parent=1 // pred_check
      _
    $region31: #{gnn_forward.1} parent=1 // pred_check_branch
      %35 = sbr.rel (0) target = $region33
    $region32: #{gnn_forward.1} parent=1 // pred_region
      _
    $region33: #{gnn_forward.1} parent=1 // pred_fallthru
      _
    // Predicated region
    $region34: #{gnn_forward.1} parent=1 // pred_check
      _
    $region35: #{gnn_forward.1} parent=1 // pred_check_branch
      %37 = sbr.rel (0) target = $region37
    $region36: #{gnn_forward.1} parent=1 // pred_region
      _
    $region37: #{gnn_forward.1} parent=1 // pred_fallthru
      _
    // Predicated region
    $region38: #{gnn_forward.1} parent=1 // pred_check
      _
    $region39: #{gnn_forward.1} parent=1 // pred_check_branch
      %39 = sbr.rel (0) target = $region41
    $region40: #{gnn_forward.1} parent=1 // pred_region
      _
    $region41: #{gnn_forward.1} parent=1 // pred_fallthru
      _
    // Predicated region
    $region42: #{gnn_forward.1} parent=1 // pred_check
      _
    $region43: #{gnn_forward.1} parent=1 // pred_check_branch
      %41 = sbr.rel (0) target = $region45
    $region44: #{gnn_forward.1} parent=1 // pred_region
      _
    $region45: #{gnn_forward.1} parent=1 // pred_fallthru
      _
    // Predicated region
    $region46: #{gnn_forward.1} parent=1 // pred_check
      _
    $region47: #{gnn_forward.1} parent=1 // pred_check_branch
      %43 = sbr.rel (0) target = $region49
    $region48: #{gnn_forward.1} parent=1 // pred_region
      _
    $region49: #{gnn_forward.1} parent=1 // pred_fallthru
      _
    // Predicated region
    $region50: #{gnn_forward.1} parent=1 // pred_check
      _
    $region51: #{gnn_forward.1} parent=1 // pred_check_branch
      %45 = sbr.rel (0) target = $region53
    $region52: #{gnn_forward.1} parent=1 // pred_region
      _
    $region53: #{gnn_forward.1} parent=1 // pred_fallthru
      _
    // Predicated region
    $region54: #{gnn_forward.1} parent=1 // pred_check
      _
    $region55: #{gnn_forward.1} parent=1 // pred_check_branch
      %47 = sbr.rel (0) target = $region57
    $region56: #{gnn_forward.1} parent=1 // pred_region
      _
    $region57: #{gnn_forward.1} parent=1 // pred_fallthru
      _
    %v49 = vld [vmem:[%s0] sm:$0xf]
    %v50 = vld [vmem:[%s0 + $0x4] sm:$0xf]
    %v51 = vld [vmem:[%s1] sm:$0xf]
    %v52 = vld [vmem:[%s1 + $0x4] sm:$0xf]
    %v53 = vld [vmem:[%s3] sm:$0xf]
    %v54 = vld [vmem:[%s3 + $0x4] sm:$0xf]
    %v55 = vld [vmem:[%s3 + $0x8] sm:$0xf]
    %v56 = vld [vmem:[%s3 + $0xc] sm:$0xf]
    %v57 = vld [vmem:[%s5] sm:$0xf]
    %v58 = vld [vmem:[%s5 + $0x4] sm:$0xf]
    %v59 = vld [vmem:[%s5 + $0x8] sm:$0xf]
    %v60 = vld [vmem:[%s5 + $0xc] sm:$0xf]
    %v61 = vld [vmem:[%s4] sm:$0x1]
    %v62 = vld [vmem:[%s6] sm:$0x1]
    %v63 = vld [vmem:[%s7] sm:$0x1]
    %v64 = vld [vmem:[%s8] sm:$0x1]
    %v65 = vld [vmem:[%s9] sm:$0xf]
    %v66 = vld [vmem:[%s9 + $0x4] sm:$0xf]
    %v67 = vld [vmem:[%s9 + $0x8] sm:$0xf]
    %v68 = vld [vmem:[%s9 + $0xc] sm:$0xf]
    %s69 = scalar_lea.vmem %s9, 16
    %v70 = vld [vmem:[%s69] sm:$0xf]
    %v71 = vld [vmem:[%s69 + $0x4] sm:$0xf]
    %v72 = vld [vmem:[%s69 + $0x8] sm:$0xf]
    %v73 = vld [vmem:[%s69 + $0xc] sm:$0xf]
    %s74 = scalar_lea.vmem %s9, 32
    %v75 = vld [vmem:[%s74] sm:$0xf]
    %v76 = vld [vmem:[%s74 + $0x4] sm:$0xf]
    %v77 = vld [vmem:[%s74 + $0x8] sm:$0xf]
    %v78 = vld [vmem:[%s74 + $0xc] sm:$0xf]
    %v79 = vld [vmem:[%s10] sm:$0xf]
    %v80 = vld [vmem:[%s10 + $0x4] sm:$0xf]
    %v81 = vld [vmem:[%s10 + $0x8] sm:$0xf]
    %v82 = vld [vmem:[%s10 + $0xc] sm:$0xf]
    %s83 = scalar_lea.vmem %s10, 16
    %v84 = vld [vmem:[%s83] sm:$0xf]
    %v85 = vld [vmem:[%s83 + $0x4] sm:$0xf]
    %v86 = vld [vmem:[%s83 + $0x8] sm:$0xf]
    %v87 = vld [vmem:[%s83 + $0xc] sm:$0xf]
    %s88 = scalar_lea.vmem %s10, 32
    %v89 = vld [vmem:[%s88] sm:$0xf]
    %v90 = vld [vmem:[%s88 + $0x4] sm:$0xf]
    %v91 = vld [vmem:[%s88 + $0x8] sm:$0xf]
    %v92 = vld [vmem:[%s88 + $0xc] sm:$0xf]
    %v93 = vld [vmem:[%s11] sm:$0xf]
    %v94 = vld [vmem:[%s11 + $0x4] sm:$0xf]
    %v95 = vld [vmem:[%s11 + $0x8] sm:$0xf]
    %v96 = vld [vmem:[%s11 + $0xc] sm:$0xf]
    %s97 = scalar_lea.vmem %s11, 16
    %v98 = vld [vmem:[%s97] sm:$0xf]
    %v99 = vld [vmem:[%s97 + $0x4] sm:$0xf]
    %v100 = vld [vmem:[%s97 + $0x8] sm:$0xf]
    %v101 = vld [vmem:[%s97 + $0xc] sm:$0xf]
    %s102 = scalar_lea.vmem %s11, 32
    %v103 = vld [vmem:[%s102] sm:$0xf]
    %v104 = vld [vmem:[%s102 + $0x4] sm:$0xf]
    %v105 = vld [vmem:[%s102 + $0x8] sm:$0xf]
    %v106 = vld [vmem:[%s102 + $0xc] sm:$0xf]
    %v107 = vld [vmem:[%s12] sm:$0x1]
    %s108 = scalar_lea.vmem %s12, 1
    %v109 = vld [vmem:[%s108] sm:$0x1]
    %s110 = scalar_lea.vmem %s12, 2
    %v111 = vld [vmem:[%s110] sm:$0x1]
    %v112 = vld [vmem:[%s13] sm:$0x1]
    %s113 = scalar_lea.vmem %s13, 1
    %v114 = vld [vmem:[%s113] sm:$0x1]
    %s115 = scalar_lea.vmem %s13, 2
    %v116 = vld [vmem:[%s115] sm:$0x1]
    %v117 = vld [vmem:[%s2] sm:$0xff]
    %v118 = vld [vmem:[%s2 + $0x8] sm:$0xff]
    %v119 = vpack.c.bf16 %v118, %v117
    %v121 = vlaneseq
    %v122 = vshrl.u32 %v121, 7
    %v123 = vsub.s32 0, %v122
    %v124 = vrot.slane %v61, %v123
    %v130 = vunpack.c.l.b16 %v53
    %v131 = vunpack.c.l.b16 %v54
    %v132 = vunpack.c.l.b16 %v55
    %v133 = vunpack.c.l.b16 %v56
    %v134 = vpack.c.b16 %v131, %v130
    %v135 = vpack.c.b16 %v133, %v132
    %vm138 = vcmask 261120
    %v140 = vsel %vm138, %v119, 0
    %142 = vmatprep.subr.bf16.mxu0 0
    %143 = vmatpush1.bf16.msra.mxu0 0
    %144 = vmatprep.subr.bf16.mxu0 0
    %145 = vmatpush1.bf16.msra.mxu0 0
    %146 = vmatprep.subr.bf16.mxu0 0
    %147 = vmatpush1.bf16.msra.mxu0 0
    %148 = vmatprep.subr.bf16.mxu0 0
    %149 = vmatpush1.bf16.msra.mxu0 0
    %150 = vmatprep.subr.bf16.mxu0 0
    %151 = vmatpush1.bf16.msra.mxu0 0
    %152 = vmatprep.subr.bf16.mxu0 0
    %153 = vmatpush1.bf16.msra.mxu0 0
    %154 = vmatprep.subr.bf16.mxu0 0
    %155 = vmatpush1.bf16.msra.mxu0 %v135
    %156 = vmatprep.subr.bf16.mxu0 0
    %157 = vmatpush1.bf16.msra.mxu0 %v134
    %158 = vmatprep.subr.bf16.mxu0 0
    %159 = vmatpush2.bf16.msra.mxu0 0
    %160 = vmatprep.subr.bf16.mxu0 0
    %161 = vmatpush2.bf16.msra.mxu0 0
    %162 = vmatprep.subr.bf16.mxu0 0
    %163 = vmatpush2.bf16.msra.mxu0 0
    %164 = vmatprep.subr.bf16.mxu0 0
    %165 = vmatpush2.bf16.msra.mxu0 0
    %166 = vmatprep.subr.bf16.mxu0 0
    %167 = vmatpush2.bf16.msra.mxu0 0
    %168 = vmatprep.subr.bf16.mxu0 0
    %169 = vmatpush2.bf16.msra.mxu0 0
    %170 = vmatprep.subr.bf16.mxu0 0
    %171 = vmatpush2.bf16.msra.mxu0 0
    %172 = vmatprep.subr.bf16.mxu0 0
    %173 = vmatpush2.bf16.msra.mxu0 0
    %174 = vmatprep.mubr.bf16.mxu0 0
    %175 = vmatmul.mubr.bf16.gmra.mxu0 %v140
    %v176 = vpop.f32.mrf.mxu0
    %v177 = vadd.f32 %v124, %v176
    %v178 = vpop.f32.mrf.mxu0
    %v179 = vpop.f32.mrf.mxu0
    %v180 = vadd.f32 %v124, %v179
    %v181 = vpop.f32.mrf.mxu0
    %182 = vdwg.mxu0
    %v184 = vlaneseq
    %v185 = vshrl.u32 %v184, 7
    %v186 = vsub.s32 0, %v185
    %v187 = vrot.slane %v62, %v186
    %v193 = vunpack.c.l.b16 %v57
    %v194 = vunpack.c.l.b16 %v58
    %v195 = vunpack.c.l.b16 %v59
    %v196 = vunpack.c.l.b16 %v60
    %v197 = vpack.c.b16 %v194, %v193
    %v198 = vpack.c.b16 %v196, %v195
    %201 = vmatprep.subr.bf16.mxu0 0
    %202 = vmatpush1.bf16.msra.mxu0 0
    %203 = vmatprep.subr.bf16.mxu0 0
    %204 = vmatpush1.bf16.msra.mxu0 0
    %205 = vmatprep.subr.bf16.mxu0 0
    %206 = vmatpush1.bf16.msra.mxu0 0
    %207 = vmatprep.subr.bf16.mxu0 0
    %208 = vmatpush1.bf16.msra.mxu0 0
    %209 = vmatprep.subr.bf16.mxu0 0
    %210 = vmatpush1.bf16.msra.mxu0 0
    %211 = vmatprep.subr.bf16.mxu0 0
    %212 = vmatpush1.bf16.msra.mxu0 0
    %213 = vmatprep.subr.bf16.mxu0 0
    %214 = vmatpush1.bf16.msra.mxu0 %v198
    %215 = vmatprep.subr.bf16.mxu0 0
    %216 = vmatpush1.bf16.msra.mxu0 %v197
    %217 = vmatprep.subr.bf16.mxu0 0
    %218 = vmatpush2.bf16.msra.mxu0 0
    %219 = vmatprep.subr.bf16.mxu0 0
    %220 = vmatpush2.bf16.msra.mxu0 0
    %221 = vmatprep.subr.bf16.mxu0 0
    %222 = vmatpush2.bf16.msra.mxu0 0
    %223 = vmatprep.subr.bf16.mxu0 0
    %224 = vmatpush2.bf16.msra.mxu0 0
    %225 = vmatprep.subr.bf16.mxu0 0
    %226 = vmatpush2.bf16.msra.mxu0 0
    %227 = vmatprep.subr.bf16.mxu0 0
    %228 = vmatpush2.bf16.msra.mxu0 0
    %229 = vmatprep.subr.bf16.mxu0 0
    %230 = vmatpush2.bf16.msra.mxu0 0
    %231 = vmatprep.subr.bf16.mxu0 0
    %232 = vmatpush2.bf16.msra.mxu0 0
    %233 = vmatprep.mubr.bf16.mxu0 0
    %234 = vmatmul.mubr.bf16.gmra.mxu0 %v140
    %v235 = vpop.f32.mrf.mxu0
    %v236 = vadd.f32 %v187, %v235
    %v237 = vpop.f32.mrf.mxu0
    %v238 = vpop.f32.mrf.mxu0
    %v239 = vadd.f32 %v187, %v238
    %v240 = vpop.f32.mrf.mxu0
    %241 = vdwg.mxu0
    %v242 = vpack.c.bf16 %v180, %v177
    %v244 = vunpack.c.l.b16 %v242
    %v245 = vunpack.c.h.b16 %v242
    %v246 = vpack.c.b16 %v244, %v244
    %v247 = vpack.c.b16 %v245, %v245
    %v248 = vpack.c.bf16 %v239, %v236
    %v250 = vunpack.c.l.b16 %v248
    %v251 = vunpack.c.h.b16 %v248
    %v252 = vpack.c.b16 %v250, %v250
    %v253 = vpack.c.b16 %v251, %v251
    %vm254 = vcmask 64512
    %v256 = vsel %vm254, %v49, 0
    %vm258 = vcmask 1043456
    %v260 = vsel %vm258, %v246, 0
    %262 = vmatprep.subr.bf16.mxu0 0
    %263 = vmatpush1.bf16.msra.mxu0 0
    %264 = vmatprep.subr.bf16.mxu0 0
    %265 = vmatpush1.bf16.msra.mxu0 0
    %266 = vmatprep.subr.bf16.mxu0 0
    %267 = vmatpush1.bf16.msra.mxu0 0
    %268 = vmatprep.subr.bf16.mxu0 0
    %269 = vmatpush1.bf16.msra.mxu0 0
    %270 = vmatprep.subr.bf16.mxu0 0
    %271 = vmatpush1.bf16.msra.mxu0 0
    %272 = vmatprep.subr.bf16.mxu0 0
    %273 = vmatpush1.bf16.msra.mxu0 0
    %274 = vmatprep.subr.bf16.mxu0 0
    %275 = vmatpush1.bf16.msra.mxu0 0
    %276 = vmatprep.subr.bf16.mxu0 0
    %277 = vmatpush1.bf16.msra.mxu0 %v260
    %278 = vmatprep.subr.bf16.mxu0 0
    %279 = vmatpush2.bf16.msra.mxu0 0
    %280 = vmatprep.subr.bf16.mxu0 0
    %281 = vmatpush2.bf16.msra.mxu0 0
    %282 = vmatprep.subr.bf16.mxu0 0
    %283 = vmatpush2.bf16.msra.mxu0 0
    %284 = vmatprep.subr.bf16.mxu0 0
    %285 = vmatpush2.bf16.msra.mxu0 0
    %286 = vmatprep.subr.bf16.mxu0 0
    %287 = vmatpush2.bf16.msra.mxu0 0
    %288 = vmatprep.subr.bf16.mxu0 0
    %289 = vmatpush2.bf16.msra.mxu0 0
    %290 = vmatprep.subr.bf16.mxu0 0
    %291 = vmatpush2.bf16.msra.mxu0 0
    %292 = vmatprep.subr.bf16.mxu0 0
    %293 = vmatpush2.bf16.msra.mxu0 0
    %294 = vmatprep.mubr.bf16.mxu0 0
    %295 = vmatmul.mubr.bf16.gmra.mxu0 %v256
    %v296 = vpop.f32.mrf.mxu0
    %v297 = vadd.f32 0.0, %v296
    %v298 = vpop.f32.mrf.mxu0
    %v299 = vpop.f32.mrf.mxu0
    %v300 = vpop.f32.mrf.mxu0
    %301 = vdwg.mxu0
    %v303 = vsel %vm254, %v50, 0
    %v306 = vsel %vm258, %v247, 0
    %308 = vmatprep.subr.bf16.mxu0 0
    %309 = vmatpush1.bf16.msra.mxu0 0
    %310 = vmatprep.subr.bf16.mxu0 0
    %311 = vmatpush1.bf16.msra.mxu0 0
    %312 = vmatprep.subr.bf16.mxu0 0
    %313 = vmatpush1.bf16.msra.mxu0 0
    %314 = vmatprep.subr.bf16.mxu0 0
    %315 = vmatpush1.bf16.msra.mxu0 0
    %316 = vmatprep.subr.bf16.mxu0 0
    %317 = vmatpush1.bf16.msra.mxu0 0
    %318 = vmatprep.subr.bf16.mxu0 0
    %319 = vmatpush1.bf16.msra.mxu0 0
    %320 = vmatprep.subr.bf16.mxu0 0
    %321 = vmatpush1.bf16.msra.mxu0 0
    %322 = vmatprep.subr.bf16.mxu0 0
    %323 = vmatpush1.bf16.msra.mxu0 %v306
    %324 = vmatprep.subr.bf16.mxu0 0
    %325 = vmatpush2.bf16.msra.mxu0 0
    %326 = vmatprep.subr.bf16.mxu0 0
    %327 = vmatpush2.bf16.msra.mxu0 0
    %328 = vmatprep.subr.bf16.mxu0 0
    %329 = vmatpush2.bf16.msra.mxu0 0
    %330 = vmatprep.subr.bf16.mxu0 0
    %331 = vmatpush2.bf16.msra.mxu0 0
    %332 = vmatprep.subr.bf16.mxu0 0
    %333 = vmatpush2.bf16.msra.mxu0 0
    %334 = vmatprep.subr.bf16.mxu0 0
    %335 = vmatpush2.bf16.msra.mxu0 0
    %336 = vmatprep.subr.bf16.mxu0 0
    %337 = vmatpush2.bf16.msra.mxu0 0
    %338 = vmatprep.subr.bf16.mxu0 0
    %339 = vmatpush2.bf16.msra.mxu0 0
    %340 = vmatprep.mubr.bf16.mxu0 0
    %341 = vmatmul.mubr.bf16.gmra.mxu0 %v303
    %v342 = vpop.f32.mrf.mxu0
    %v343 = vadd.f32 0.0, %v342
    %v344 = vpop.f32.mrf.mxu0
    %v345 = vpop.f32.mrf.mxu0
    %v346 = vpop.f32.mrf.mxu0
    %347 = vdwg.mxu0
    %v349 = vlaneseq
    %v350 = vshrl.u32 %v349, 7
    %v351 = vsub.s32 0, %v350
    %v352 = vrot.slane %v63, %v351
    %v354 = vadd.f32 %v297, %v352
    %v355 = vadd.f32 %v343, %v352
    %v357 = vsel %vm254, %v51, 0
    %v360 = vsel %vm258, %v252, 0
    %362 = vmatprep.subr.bf16.mxu0 0
    %363 = vmatpush1.bf16.msra.mxu0 0
    %364 = vmatprep.subr.bf16.mxu0 0
    %365 = vmatpush1.bf16.msra.mxu0 0
    %366 = vmatprep.subr.bf16.mxu0 0
    %367 = vmatpush1.bf16.msra.mxu0 0
    %368 = vmatprep.subr.bf16.mxu0 0
    %369 = vmatpush1.bf16.msra.mxu0 0
    %370 = vmatprep.subr.bf16.mxu0 0
    %371 = vmatpush1.bf16.msra.mxu0 0
    %372 = vmatprep.subr.bf16.mxu0 0
    %373 = vmatpush1.bf16.msra.mxu0 0
    %374 = vmatprep.subr.bf16.mxu0 0
    %375 = vmatpush1.bf16.msra.mxu0 0
    %376 = vmatprep.subr.bf16.mxu0 0
    %377 = vmatpush1.bf16.msra.mxu0 %v360
    %378 = vmatprep.subr.bf16.mxu0 0
    %379 = vmatpush2.bf16.msra.mxu0 0
    %380 = vmatprep.subr.bf16.mxu0 0
    %381 = vmatpush2.bf16.msra.mxu0 0
    %382 = vmatprep.subr.bf16.mxu0 0
    %383 = vmatpush2.bf16.msra.mxu0 0
    %384 = vmatprep.subr.bf16.mxu0 0
    %385 = vmatpush2.bf16.msra.mxu0 0
    %386 = vmatprep.subr.bf16.mxu0 0
    %387 = vmatpush2.bf16.msra.mxu0 0
    %388 = vmatprep.subr.bf16.mxu0 0
    %389 = vmatpush2.bf16.msra.mxu0 0
    %390 = vmatprep.subr.bf16.mxu0 0
    %391 = vmatpush2.bf16.msra.mxu0 0
    %392 = vmatprep.subr.bf16.mxu0 0
    %393 = vmatpush2.bf16.msra.mxu0 0
    %394 = vmatprep.mubr.bf16.mxu0 0
    %395 = vmatmul.mubr.bf16.gmra.mxu0 %v357
    %v396 = vpop.f32.mrf.mxu0
    %v397 = vadd.f32 0.0, %v396
    %v398 = vpop.f32.mrf.mxu0
    %v399 = vpop.f32.mrf.mxu0
    %v400 = vpop.f32.mrf.mxu0
    %401 = vdwg.mxu0
    %v403 = vsel %vm254, %v52, 0
    %v406 = vsel %vm258, %v253, 0
    %408 = vmatprep.subr.bf16.mxu0 0
    %409 = vmatpush1.bf16.msra.mxu0 0
    %410 = vmatprep.subr.bf16.mxu0 0
    %411 = vmatpush1.bf16.msra.mxu0 0
    %412 = vmatprep.subr.bf16.mxu0 0
    %413 = vmatpush1.bf16.msra.mxu0 0
    %414 = vmatprep.subr.bf16.mxu0 0
    %415 = vmatpush1.bf16.msra.mxu0 0
    %416 = vmatprep.subr.bf16.mxu0 0
    %417 = vmatpush1.bf16.msra.mxu0 0
    %418 = vmatprep.subr.bf16.mxu0 0
    %419 = vmatpush1.bf16.msra.mxu0 0
    %420 = vmatprep.subr.bf16.mxu0 0
    %421 = vmatpush1.bf16.msra.mxu0 0
    %422 = vmatprep.subr.bf16.mxu0 0
    %423 = vmatpush1.bf16.msra.mxu0 %v406
    %424 = vmatprep.subr.bf16.mxu0 0
    %425 = vmatpush2.bf16.msra.mxu0 0
    %426 = vmatprep.subr.bf16.mxu0 0
    %427 = vmatpush2.bf16.msra.mxu0 0
    %428 = vmatprep.subr.bf16.mxu0 0
    %429 = vmatpush2.bf16.msra.mxu0 0
    %430 = vmatprep.subr.bf16.mxu0 0
    %431 = vmatpush2.bf16.msra.mxu0 0
    %432 = vmatprep.subr.bf16.mxu0 0
    %433 = vmatpush2.bf16.msra.mxu0 0
    %434 = vmatprep.subr.bf16.mxu0 0
    %435 = vmatpush2.bf16.msra.mxu0 0
    %436 = vmatprep.subr.bf16.mxu0 0
    %437 = vmatpush2.bf16.msra.mxu0 0
    %438 = vmatprep.subr.bf16.mxu0 0
    %439 = vmatpush2.bf16.msra.mxu0 0
    %440 = vmatprep.mubr.bf16.mxu0 0
    %441 = vmatmul.mubr.bf16.gmra.mxu0 %v403
    %v442 = vpop.f32.mrf.mxu0
    %v443 = vadd.f32 0.0, %v442
    %v444 = vpop.f32.mrf.mxu0
    %v445 = vpop.f32.mrf.mxu0
    %v446 = vpop.f32.mrf.mxu0
    %447 = vdwg.mxu0
    %v449 = vlaneseq
    %v450 = vshrl.u32 %v449, 7
    %v451 = vsub.s32 0, %v450
    %v452 = vrot.slane %v64, %v451
    %v454 = vadd.f32 %v397, %v452
    %v455 = vadd.f32 %v443, %v452
    %v456 = vpack.c.bf16 %v355, %v354
    %v457 = vpack.c.bf16 %v455, %v454
    %v462 = vunpack.c.l.b16 %v79
    %v463 = vunpack.c.l.b16 %v80
    %v464 = vunpack.c.l.b16 %v81
    %v465 = vunpack.c.l.b16 %v82
    %v466 = vpack.c.b16 %v463, %v462
    %v467 = vpack.c.b16 %v465, %v464
    %v471 = vsel %vm138, %v457, 0
    %473 = vmatprep.subr.bf16.mxu0 0
    %474 = vmatpush1.bf16.msra.mxu0 0
    %475 = vmatprep.subr.bf16.mxu0 0
    %476 = vmatpush1.bf16.msra.mxu0 0
    %477 = vmatprep.subr.bf16.mxu0 0
    %478 = vmatpush1.bf16.msra.mxu0 0
    %479 = vmatprep.subr.bf16.mxu0 0
    %480 = vmatpush1.bf16.msra.mxu0 0
    %481 = vmatprep.subr.bf16.mxu0 0
    %482 = vmatpush1.bf16.msra.mxu0 0
    %483 = vmatprep.subr.bf16.mxu0 0
    %484 = vmatpush1.bf16.msra.mxu0 0
    %485 = vmatprep.subr.bf16.mxu0 0
    %486 = vmatpush1.bf16.msra.mxu0 %v467
    %487 = vmatprep.subr.bf16.mxu0 0
    %488 = vmatpush1.bf16.msra.mxu0 %v466
    %489 = vmatprep.subr.bf16.mxu0 0
    %490 = vmatpush2.bf16.msra.mxu0 0
    %491 = vmatprep.subr.bf16.mxu0 0
    %492 = vmatpush2.bf16.msra.mxu0 0
    %493 = vmatprep.subr.bf16.mxu0 0
    %494 = vmatpush2.bf16.msra.mxu0 0
    %495 = vmatprep.subr.bf16.mxu0 0
    %496 = vmatpush2.bf16.msra.mxu0 0
    %497 = vmatprep.subr.bf16.mxu0 0
    %498 = vmatpush2.bf16.msra.mxu0 0
    %499 = vmatprep.subr.bf16.mxu0 0
    %500 = vmatpush2.bf16.msra.mxu0 0
    %501 = vmatprep.subr.bf16.mxu0 0
    %502 = vmatpush2.bf16.msra.mxu0 0
    %503 = vmatprep.subr.bf16.mxu0 0
    %504 = vmatpush2.bf16.msra.mxu0 0
    %505 = vmatprep.mubr.bf16.mxu0 0
    %506 = vmatmul.mubr.bf16.gmra.mxu0 %v471
    %v507 = vpop.f32.mrf.mxu0
    %v508 = vadd.f32 0.0, %v507
    %v509 = vpop.f32.mrf.mxu0
    %v510 = vpop.f32.mrf.mxu0
    %v511 = vadd.f32 0.0, %v510
    %v512 = vpop.f32.mrf.mxu0
    %513 = vdwg.mxu0
    %v518 = vunpack.c.l.b16 %v65
    %v519 = vunpack.c.l.b16 %v66
    %v520 = vunpack.c.l.b16 %v67
    %v521 = vunpack.c.l.b16 %v68
    %v522 = vpack.c.b16 %v519, %v518
    %v523 = vpack.c.b16 %v521, %v520
    %v527 = vsel %vm138, %v456, 0
    %529 = vmatprep.subr.bf16.mxu0 0
    %530 = vmatpush1.bf16.msra.mxu0 0
    %531 = vmatprep.subr.bf16.mxu0 0
    %532 = vmatpush1.bf16.msra.mxu0 0
    %533 = vmatprep.subr.bf16.mxu0 0
    %534 = vmatpush1.bf16.msra.mxu0 0
    %535 = vmatprep.subr.bf16.mxu0 0
    %536 = vmatpush1.bf16.msra.mxu0 0
    %537 = vmatprep.subr.bf16.mxu0 0
    %538 = vmatpush1.bf16.msra.mxu0 0
    %539 = vmatprep.subr.bf16.mxu0 0
    %540 = vmatpush1.bf16.msra.mxu0 0
    %541 = vmatprep.subr.bf16.mxu0 0
    %542 = vmatpush1.bf16.msra.mxu0 %v523
    %543 = vmatprep.subr.bf16.mxu0 0
    %544 = vmatpush1.bf16.msra.mxu0 %v522
    %545 = vmatprep.subr.bf16.mxu0 0
    %546 = vmatpush2.bf16.msra.mxu0 0
    %547 = vmatprep.subr.bf16.mxu0 0
    %548 = vmatpush2.bf16.msra.mxu0 0
    %549 = vmatprep.subr.bf16.mxu0 0
    %550 = vmatpush2.bf16.msra.mxu0 0
    %551 = vmatprep.subr.bf16.mxu0 0
    %552 = vmatpush2.bf16.msra.mxu0 0
    %553 = vmatprep.subr.bf16.mxu0 0
    %554 = vmatpush2.bf16.msra.mxu0 0
    %555 = vmatprep.subr.bf16.mxu0 0
    %556 = vmatpush2.bf16.msra.mxu0 0
    %557 = vmatprep.subr.bf16.mxu0 0
    %558 = vmatpush2.bf16.msra.mxu0 0
    %559 = vmatprep.subr.bf16.mxu0 0
    %560 = vmatpush2.bf16.msra.mxu0 0
    %561 = vmatprep.mubr.bf16.mxu0 0
    %562 = vmatmul.mubr.bf16.gmra.mxu0 %v527
    %v563 = vpop.f32.mrf.mxu0
    %v564 = vadd.f32 %v508, %v563
    %v565 = vpop.f32.mrf.mxu0
    %v566 = vpop.f32.mrf.mxu0
    %v567 = vadd.f32 %v511, %v566
    %v568 = vpop.f32.mrf.mxu0
    %569 = vdwg.mxu0
    %v571 = vlaneseq
    %v572 = vshrl.u32 %v571, 7
    %v573 = vsub.s32 0, %v572
    %v574 = vrot.slane %v107, %v573
    %v576 = vadd.f32 %v564, %v574
    %v577 = vadd.f32 %v567, %v574
    %v579 = vlaneseq
    %v580 = vshrl.u32 %v579, 7
    %v581 = vsub.s32 0, %v580
    %v582 = vrot.slane %v112, %v581
    %v588 = vunpack.c.l.b16 %v93
    %v589 = vunpack.c.l.b16 %v94
    %v590 = vunpack.c.l.b16 %v95
    %v591 = vunpack.c.l.b16 %v96
    %v592 = vpack.c.b16 %v589, %v588
    %v593 = vpack.c.b16 %v591, %v590
    %596 = vmatprep.subr.bf16.mxu0 0
    %597 = vmatpush1.bf16.msra.mxu0 0
    %598 = vmatprep.subr.bf16.mxu0 0
    %599 = vmatpush1.bf16.msra.mxu0 0
    %600 = vmatprep.subr.bf16.mxu0 0
    %601 = vmatpush1.bf16.msra.mxu0 0
    %602 = vmatprep.subr.bf16.mxu0 0
    %603 = vmatpush1.bf16.msra.mxu0 0
    %604 = vmatprep.subr.bf16.mxu0 0
    %605 = vmatpush1.bf16.msra.mxu0 0
    %606 = vmatprep.subr.bf16.mxu0 0
    %607 = vmatpush1.bf16.msra.mxu0 0
    %608 = vmatprep.subr.bf16.mxu0 0
    %609 = vmatpush1.bf16.msra.mxu0 %v593
    %610 = vmatprep.subr.bf16.mxu0 0
    %611 = vmatpush1.bf16.msra.mxu0 %v592
    %612 = vmatprep.subr.bf16.mxu0 0
    %613 = vmatpush2.bf16.msra.mxu0 0
    %614 = vmatprep.subr.bf16.mxu0 0
    %615 = vmatpush2.bf16.msra.mxu0 0
    %616 = vmatprep.subr.bf16.mxu0 0
    %617 = vmatpush2.bf16.msra.mxu0 0
    %618 = vmatprep.subr.bf16.mxu0 0
    %619 = vmatpush2.bf16.msra.mxu0 0
    %620 = vmatprep.subr.bf16.mxu0 0
    %621 = vmatpush2.bf16.msra.mxu0 0
    %622 = vmatprep.subr.bf16.mxu0 0
    %623 = vmatpush2.bf16.msra.mxu0 0
    %624 = vmatprep.subr.bf16.mxu0 0
    %625 = vmatpush2.bf16.msra.mxu0 0
    %626 = vmatprep.subr.bf16.mxu0 0
    %627 = vmatpush2.bf16.msra.mxu0 0
    %628 = vmatprep.mubr.bf16.mxu0 0
    %629 = vmatmul.mubr.bf16.gmra.mxu0 %v140
    %v630 = vpop.f32.mrf.mxu0
    %v631 = vadd.f32 %v582, %v630
    %v632 = vpop.f32.mrf.mxu0
    %v633 = vpop.f32.mrf.mxu0
    %v634 = vadd.f32 %v582, %v633
    %v635 = vpop.f32.mrf.mxu0
    %636 = vdwg.mxu0
    %v641 = vunpack.c.l.b16 %v84
    %v642 = vunpack.c.l.b16 %v85
    %v643 = vunpack.c.l.b16 %v86
    %v644 = vunpack.c.l.b16 %v87
    %v645 = vpack.c.b16 %v642, %v641
    %v646 = vpack.c.b16 %v644, %v643
    %649 = vmatprep.subr.bf16.mxu0 0
    %650 = vmatpush1.bf16.msra.mxu0 0
    %651 = vmatprep.subr.bf16.mxu0 0
    %652 = vmatpush1.bf16.msra.mxu0 0
    %653 = vmatprep.subr.bf16.mxu0 0
    %654 = vmatpush1.bf16.msra.mxu0 0
    %655 = vmatprep.subr.bf16.mxu0 0
    %656 = vmatpush1.bf16.msra.mxu0 0
    %657 = vmatprep.subr.bf16.mxu0 0
    %658 = vmatpush1.bf16.msra.mxu0 0
    %659 = vmatprep.subr.bf16.mxu0 0
    %660 = vmatpush1.bf16.msra.mxu0 0
    %661 = vmatprep.subr.bf16.mxu0 0
    %662 = vmatpush1.bf16.msra.mxu0 %v646
    %663 = vmatprep.subr.bf16.mxu0 0
    %664 = vmatpush1.bf16.msra.mxu0 %v645
    %665 = vmatprep.subr.bf16.mxu0 0
    %666 = vmatpush2.bf16.msra.mxu0 0
    %667 = vmatprep.subr.bf16.mxu0 0
    %668 = vmatpush2.bf16.msra.mxu0 0
    %669 = vmatprep.subr.bf16.mxu0 0
    %670 = vmatpush2.bf16.msra.mxu0 0
    %671 = vmatprep.subr.bf16.mxu0 0
    %672 = vmatpush2.bf16.msra.mxu0 0
    %673 = vmatprep.subr.bf16.mxu0 0
    %674 = vmatpush2.bf16.msra.mxu0 0
    %675 = vmatprep.subr.bf16.mxu0 0
    %676 = vmatpush2.bf16.msra.mxu0 0
    %677 = vmatprep.subr.bf16.mxu0 0
    %678 = vmatpush2.bf16.msra.mxu0 0
    %679 = vmatprep.subr.bf16.mxu0 0
    %680 = vmatpush2.bf16.msra.mxu0 0
    %681 = vmatprep.mubr.bf16.mxu0 0
    %682 = vmatmul.mubr.bf16.gmra.mxu0 %v471
    %v683 = vpop.f32.mrf.mxu0
    %v684 = vadd.f32 0.0, %v683
    %v685 = vpop.f32.mrf.mxu0
    %v686 = vpop.f32.mrf.mxu0
    %v687 = vadd.f32 0.0, %v686
    %v688 = vpop.f32.mrf.mxu0
    %689 = vdwg.mxu0
    %v694 = vunpack.c.l.b16 %v70
    %v695 = vunpack.c.l.b16 %v71
    %v696 = vunpack.c.l.b16 %v72
    %v697 = vunpack.c.l.b16 %v73
    %v698 = vpack.c.b16 %v695, %v694
    %v699 = vpack.c.b16 %v697, %v696
    %702 = vmatprep.subr.bf16.mxu0 0
    %703 = vmatpush1.bf16.msra.mxu0 0
    %704 = vmatprep.subr.bf16.mxu0 0
    %705 = vmatpush1.bf16.msra.mxu0 0
    %706 = vmatprep.subr.bf16.mxu0 0
    %707 = vmatpush1.bf16.msra.mxu0 0
    %708 = vmatprep.subr.bf16.mxu0 0
    %709 = vmatpush1.bf16.msra.mxu0 0
    %710 = vmatprep.subr.bf16.mxu0 0
    %711 = vmatpush1.bf16.msra.mxu0 0
    %712 = vmatprep.subr.bf16.mxu0 0
    %713 = vmatpush1.bf16.msra.mxu0 0
    %714 = vmatprep.subr.bf16.mxu0 0
    %715 = vmatpush1.bf16.msra.mxu0 %v699
    %716 = vmatprep.subr.bf16.mxu0 0
    %717 = vmatpush1.bf16.msra.mxu0 %v698
    %718 = vmatprep.subr.bf16.mxu0 0
    %719 = vmatpush2.bf16.msra.mxu0 0
    %720 = vmatprep.subr.bf16.mxu0 0
    %721 = vmatpush2.bf16.msra.mxu0 0
    %722 = vmatprep.subr.bf16.mxu0 0
    %723 = vmatpush2.bf16.msra.mxu0 0
    %724 = vmatprep.subr.bf16.mxu0 0
    %725 = vmatpush2.bf16.msra.mxu0 0
    %726 = vmatprep.subr.bf16.mxu0 0
    %727 = vmatpush2.bf16.msra.mxu0 0
    %728 = vmatprep.subr.bf16.mxu0 0
    %729 = vmatpush2.bf16.msra.mxu0 0
    %730 = vmatprep.subr.bf16.mxu0 0
    %731 = vmatpush2.bf16.msra.mxu0 0
    %732 = vmatprep.subr.bf16.mxu0 0
    %733 = vmatpush2.bf16.msra.mxu0 0
    %734 = vmatprep.mubr.bf16.mxu0 0
    %735 = vmatmul.mubr.bf16.gmra.mxu0 %v527
    %v736 = vpop.f32.mrf.mxu0
    %v737 = vadd.f32 %v684, %v736
    %v738 = vpop.f32.mrf.mxu0
    %v739 = vpop.f32.mrf.mxu0
    %v740 = vadd.f32 %v687, %v739
    %v741 = vpop.f32.mrf.mxu0
    %742 = vdwg.mxu0
    %v744 = vlaneseq
    %v745 = vshrl.u32 %v744, 7
    %v746 = vsub.s32 0, %v745
    %v747 = vrot.slane %v109, %v746
    %v749 = vadd.f32 %v737, %v747
    %v750 = vadd.f32 %v740, %v747
    %v752 = vlaneseq
    %v753 = vshrl.u32 %v752, 7
    %v754 = vsub.s32 0, %v753
    %v755 = vrot.slane %v114, %v754
    %v761 = vunpack.c.l.b16 %v98
    %v762 = vunpack.c.l.b16 %v99
    %v763 = vunpack.c.l.b16 %v100
    %v764 = vunpack.c.l.b16 %v101
    %v765 = vpack.c.b16 %v762, %v761
    %v766 = vpack.c.b16 %v764, %v763
    %769 = vmatprep.subr.bf16.mxu0 0
    %770 = vmatpush1.bf16.msra.mxu0 0
    %771 = vmatprep.subr.bf16.mxu0 0
    %772 = vmatpush1.bf16.msra.mxu0 0
    %773 = vmatprep.subr.bf16.mxu0 0
    %774 = vmatpush1.bf16.msra.mxu0 0
    %775 = vmatprep.subr.bf16.mxu0 0
    %776 = vmatpush1.bf16.msra.mxu0 0
    %777 = vmatprep.subr.bf16.mxu0 0
    %778 = vmatpush1.bf16.msra.mxu0 0
    %779 = vmatprep.subr.bf16.mxu0 0
    %780 = vmatpush1.bf16.msra.mxu0 0
    %781 = vmatprep.subr.bf16.mxu0 0
    %782 = vmatpush1.bf16.msra.mxu0 %v766
    %783 = vmatprep.subr.bf16.mxu0 0
    %784 = vmatpush1.bf16.msra.mxu0 %v765
    %785 = vmatprep.subr.bf16.mxu0 0
    %786 = vmatpush2.bf16.msra.mxu0 0
    %787 = vmatprep.subr.bf16.mxu0 0
    %788 = vmatpush2.bf16.msra.mxu0 0
    %789 = vmatprep.subr.bf16.mxu0 0
    %790 = vmatpush2.bf16.msra.mxu0 0
    %791 = vmatprep.subr.bf16.mxu0 0
    %792 = vmatpush2.bf16.msra.mxu0 0
    %793 = vmatprep.subr.bf16.mxu0 0
    %794 = vmatpush2.bf16.msra.mxu0 0
    %795 = vmatprep.subr.bf16.mxu0 0
    %796 = vmatpush2.bf16.msra.mxu0 0
    %797 = vmatprep.subr.bf16.mxu0 0
    %798 = vmatpush2.bf16.msra.mxu0 0
    %799 = vmatprep.subr.bf16.mxu0 0
    %800 = vmatpush2.bf16.msra.mxu0 0
    %801 = vmatprep.mubr.bf16.mxu0 0
    %802 = vmatmul.mubr.bf16.gmra.mxu0 %v140
    %v803 = vpop.f32.mrf.mxu0
    %v804 = vadd.f32 %v755, %v803
    %v805 = vpop.f32.mrf.mxu0
    %v806 = vpop.f32.mrf.mxu0
    %v807 = vadd.f32 %v755, %v806
    %v808 = vpop.f32.mrf.mxu0
    %809 = vdwg.mxu0
    %v814 = vunpack.c.l.b16 %v89
    %v815 = vunpack.c.l.b16 %v90
    %v816 = vunpack.c.l.b16 %v91
    %v817 = vunpack.c.l.b16 %v92
    %v818 = vpack.c.b16 %v815, %v814
    %v819 = vpack.c.b16 %v817, %v816
    %822 = vmatprep.subr.bf16.mxu0 0
    %823 = vmatpush1.bf16.msra.mxu0 0
    %824 = vmatprep.subr.bf16.mxu0 0
    %825 = vmatpush1.bf16.msra.mxu0 0
    %826 = vmatprep.subr.bf16.mxu0 0
    %827 = vmatpush1.bf16.msra.mxu0 0
    %828 = vmatprep.subr.bf16.mxu0 0
    %829 = vmatpush1.bf16.msra.mxu0 0
    %830 = vmatprep.subr.bf16.mxu0 0
    %831 = vmatpush1.bf16.msra.mxu0 0
    %832 = vmatprep.subr.bf16.mxu0 0
    %833 = vmatpush1.bf16.msra.mxu0 0
    %834 = vmatprep.subr.bf16.mxu0 0
    %835 = vmatpush1.bf16.msra.mxu0 %v819
    %836 = vmatprep.subr.bf16.mxu0 0
    %837 = vmatpush1.bf16.msra.mxu0 %v818
    %838 = vmatprep.subr.bf16.mxu0 0
    %839 = vmatpush2.bf16.msra.mxu0 0
    %840 = vmatprep.subr.bf16.mxu0 0
    %841 = vmatpush2.bf16.msra.mxu0 0
    %842 = vmatprep.subr.bf16.mxu0 0
    %843 = vmatpush2.bf16.msra.mxu0 0
    %844 = vmatprep.subr.bf16.mxu0 0
    %845 = vmatpush2.bf16.msra.mxu0 0
    %846 = vmatprep.subr.bf16.mxu0 0
    %847 = vmatpush2.bf16.msra.mxu0 0
    %848 = vmatprep.subr.bf16.mxu0 0
    %849 = vmatpush2.bf16.msra.mxu0 0
    %850 = vmatprep.subr.bf16.mxu0 0
    %851 = vmatpush2.bf16.msra.mxu0 0
    %852 = vmatprep.subr.bf16.mxu0 0
    %853 = vmatpush2.bf16.msra.mxu0 0
    %854 = vmatprep.mubr.bf16.mxu0 0
    %855 = vmatmul.mubr.bf16.gmra.mxu0 %v471
    %v856 = vpop.f32.mrf.mxu0
    %v857 = vadd.f32 0.0, %v856
    %v858 = vpop.f32.mrf.mxu0
    %v859 = vpop.f32.mrf.mxu0
    %v860 = vadd.f32 0.0, %v859
    %v861 = vpop.f32.mrf.mxu0
    %862 = vdwg.mxu0
    %v867 = vunpack.c.l.b16 %v75
    %v868 = vunpack.c.l.b16 %v76
    %v869 = vunpack.c.l.b16 %v77
    %v870 = vunpack.c.l.b16 %v78
    %v871 = vpack.c.b16 %v868, %v867
    %v872 = vpack.c.b16 %v870, %v869
    %875 = vmatprep.subr.bf16.mxu0 0
    %876 = vmatpush1.bf16.msra.mxu0 0
    %877 = vmatprep.subr.bf16.mxu0 0
    %878 = vmatpush1.bf16.msra.mxu0 0
    %879 = vmatprep.subr.bf16.mxu0 0
    %880 = vmatpush1.bf16.msra.mxu0 0
    %881 = vmatprep.subr.bf16.mxu0 0
    %882 = vmatpush1.bf16.msra.mxu0 0
    %883 = vmatprep.subr.bf16.mxu0 0
    %884 = vmatpush1.bf16.msra.mxu0 0
    %885 = vmatprep.subr.bf16.mxu0 0
    %886 = vmatpush1.bf16.msra.mxu0 0
    %887 = vmatprep.subr.bf16.mxu0 0
    %888 = vmatpush1.bf16.msra.mxu0 %v872
    %889 = vmatprep.subr.bf16.mxu0 0
    %890 = vmatpush1.bf16.msra.mxu0 %v871
    %891 = vmatprep.subr.bf16.mxu0 0
    %892 = vmatpush2.bf16.msra.mxu0 0
    %893 = vmatprep.subr.bf16.mxu0 0
    %894 = vmatpush2.bf16.msra.mxu0 0
    %895 = vmatprep.subr.bf16.mxu0 0
    %896 = vmatpush2.bf16.msra.mxu0 0
    %897 = vmatprep.subr.bf16.mxu0 0
    %898 = vmatpush2.bf16.msra.mxu0 0
    %899 = vmatprep.subr.bf16.mxu0 0
    %900 = vmatpush2.bf16.msra.mxu0 0
    %901 = vmatprep.subr.bf16.mxu0 0
    %902 = vmatpush2.bf16.msra.mxu0 0
    %903 = vmatprep.subr.bf16.mxu0 0
    %904 = vmatpush2.bf16.msra.mxu0 0
    %905 = vmatprep.subr.bf16.mxu0 0
    %906 = vmatpush2.bf16.msra.mxu0 0
    %907 = vmatprep.mubr.bf16.mxu0 0
    %908 = vmatmul.mubr.bf16.gmra.mxu0 %v527
    %v909 = vpop.f32.mrf.mxu0
    %v910 = vadd.f32 %v857, %v909
    %v911 = vpop.f32.mrf.mxu0
    %v912 = vpop.f32.mrf.mxu0
    %v913 = vadd.f32 %v860, %v912
    %v914 = vpop.f32.mrf.mxu0
    %915 = vdwg.mxu0
    %v917 = vlaneseq
    %v918 = vshrl.u32 %v917, 7
    %v919 = vsub.s32 0, %v918
    %v920 = vrot.slane %v111, %v919
    %v922 = vadd.f32 %v910, %v920
    %v923 = vadd.f32 %v913, %v920
    %v925 = vlaneseq
    %v926 = vshrl.u32 %v925, 7
    %v927 = vsub.s32 0, %v926
    %v928 = vrot.slane %v116, %v927
    %v934 = vunpack.c.l.b16 %v103
    %v935 = vunpack.c.l.b16 %v104
    %v936 = vunpack.c.l.b16 %v105
    %v937 = vunpack.c.l.b16 %v106
    %v938 = vpack.c.b16 %v935, %v934
    %v939 = vpack.c.b16 %v937, %v936
    %942 = vmatprep.subr.bf16.mxu0 0
    %943 = vmatpush1.bf16.msra.mxu0 0
    %944 = vmatprep.subr.bf16.mxu0 0
    %945 = vmatpush1.bf16.msra.mxu0 0
    %946 = vmatprep.subr.bf16.mxu0 0
    %947 = vmatpush1.bf16.msra.mxu0 0
    %948 = vmatprep.subr.bf16.mxu0 0
    %949 = vmatpush1.bf16.msra.mxu0 0
    %950 = vmatprep.subr.bf16.mxu0 0
    %951 = vmatpush1.bf16.msra.mxu0 0
    %952 = vmatprep.subr.bf16.mxu0 0
    %953 = vmatpush1.bf16.msra.mxu0 0
    %954 = vmatprep.subr.bf16.mxu0 0
    %955 = vmatpush1.bf16.msra.mxu0 %v939
    %956 = vmatprep.subr.bf16.mxu0 0
    %957 = vmatpush1.bf16.msra.mxu0 %v938
    %958 = vmatprep.subr.bf16.mxu0 0
    %959 = vmatpush2.bf16.msra.mxu0 0
    %960 = vmatprep.subr.bf16.mxu0 0
    %961 = vmatpush2.bf16.msra.mxu0 0
    %962 = vmatprep.subr.bf16.mxu0 0
    %963 = vmatpush2.bf16.msra.mxu0 0
    %964 = vmatprep.subr.bf16.mxu0 0
    %965 = vmatpush2.bf16.msra.mxu0 0
    %966 = vmatprep.subr.bf16.mxu0 0
    %967 = vmatpush2.bf16.msra.mxu0 0
    %968 = vmatprep.subr.bf16.mxu0 0
    %969 = vmatpush2.bf16.msra.mxu0 0
    %970 = vmatprep.subr.bf16.mxu0 0
    %971 = vmatpush2.bf16.msra.mxu0 0
    %972 = vmatprep.subr.bf16.mxu0 0
    %973 = vmatpush2.bf16.msra.mxu0 0
    %974 = vmatprep.mubr.bf16.mxu0 0
    %975 = vmatmul.mubr.bf16.gmra.mxu0 %v140
    %v976 = vpop.f32.mrf.mxu0
    %v977 = vadd.f32 %v928, %v976
    %v978 = vpop.f32.mrf.mxu0
    %v979 = vpop.f32.mrf.mxu0
    %v980 = vadd.f32 %v928, %v979
    %v981 = vpop.f32.mrf.mxu0
    %982 = vdwg.mxu0
    %v983 = vadd.f32 %v576, %v631
    %v984 = vadd.f32 %v577, %v634
    %v985 = vxor.u32 %v983, 2147483648
    %v986 = vxor.u32 %v984, 2147483648
    %v987 = vmul.f32 %v985, 1.442695
    %v988 = vpow.pop %v987
    %v989 = vmul.f32 %v986, 1.442695
    %v990 = vpow.pop %v989
    %v991 = vadd.f32 %v988, 1.0
    %v992 = vadd.f32 %v990, 1.0
    %v993 = vrcp.pop %v991
    %v994 = vmul.f32 1.0, %v993
    %v995 = vrcp.pop %v992
    %v996 = vmul.f32 1.0, %v995
    %v997 = vadd.f32 %v749, %v804
    %v998 = vadd.f32 %v750, %v807
    %v999 = vxor.u32 %v997, 2147483648
    %v1000 = vxor.u32 %v998, 2147483648
    %v1001 = vmul.f32 %v999, 1.442695
    %v1002 = vpow.pop %v1001
    %v1003 = vmul.f32 %v1000, 1.442695
    %v1004 = vpow.pop %v1003
    %v1005 = vadd.f32 %v1002, 1.0
    %v1006 = vadd.f32 %v1004, 1.0
    %v1007 = vrcp.pop %v1005
    %v1008 = vmul.f32 1.0, %v1007
    %v1009 = vrcp.pop %v1006
    %v1010 = vmul.f32 1.0, %v1009
    %v1011 = vmul.f32 %v994, %v977
    %v1012 = vmul.f32 %v996, %v980
    %v1013 = vadd.f32 %v922, %v1011
    %v1014 = vadd.f32 %v923, %v1012
    %v1015 = vtanh.pop %v1013
    %v1016 = vtanh.pop %v1014
    %v1017 = vsub.f32 %v117, %v1015
    %v1018 = vsub.f32 %v118, %v1016
    %v1019 = vmul.f32 %v1008, %v1017
    %v1020 = vmul.f32 %v1010, %v1018
    %v1021 = vadd.f32 %v1015, %v1019
    %v1022 = vadd.f32 %v1016, %v1020
    %v1023 = vpack.c.bf16 %v1022, %v1021
    %v1025 = vsel %vm138, %v1023, 0
    %1027 = vmatprep.subr.bf16.mxu0 0
    %1028 = vmatpush1.bf16.msra.mxu0 0
    %1029 = vmatprep.subr.bf16.mxu0 0
    %1030 = vmatpush1.bf16.msra.mxu0 0
    %1031 = vmatprep.subr.bf16.mxu0 0
    %1032 = vmatpush1.bf16.msra.mxu0 0
    %1033 = vmatprep.subr.bf16.mxu0 0
    %1034 = vmatpush1.bf16.msra.mxu0 0
    %1035 = vmatprep.subr.bf16.mxu0 0
    %1036 = vmatpush1.bf16.msra.mxu0 0
    %1037 = vmatprep.subr.bf16.mxu0 0
    %1038 = vmatpush1.bf16.msra.mxu0 0
    %1039 = vmatprep.subr.bf16.mxu0 0
    %1040 = vmatpush1.bf16.msra.mxu0 %v135
    %1041 = vmatprep.subr.bf16.mxu0 0
    %1042 = vmatpush1.bf16.msra.mxu0 %v134
    %1043 = vmatprep.subr.bf16.mxu0 0
    %1044 = vmatpush2.bf16.msra.mxu0 0
    %1045 = vmatprep.subr.bf16.mxu0 0
    %1046 = vmatpush2.bf16.msra.mxu0 0
    %1047 = vmatprep.subr.bf16.mxu0 0
    %1048 = vmatpush2.bf16.msra.mxu0 0
    %1049 = vmatprep.subr.bf16.mxu0 0
    %1050 = vmatpush2.bf16.msra.mxu0 0
    %1051 = vmatprep.subr.bf16.mxu0 0
    %1052 = vmatpush2.bf16.msra.mxu0 0
    %1053 = vmatprep.subr.bf16.mxu0 0
    %1054 = vmatpush2.bf16.msra.mxu0 0
    %1055 = vmatprep.subr.bf16.mxu0 0
    %1056 = vmatpush2.bf16.msra.mxu0 0
    %1057 = vmatprep.subr.bf16.mxu0 0
    %1058 = vmatpush2.bf16.msra.mxu0 0
    %1059 = vmatprep.mubr.bf16.mxu0 0
    %1060 = vmatmul.mubr.bf16.gmra.mxu0 %v1025
    %v1061 = vpop.f32.mrf.mxu0
    %v1062 = vadd.f32 %v124, %v1061
    %v1063 = vpop.f32.mrf.mxu0
    %v1064 = vpop.f32.mrf.mxu0
    %v1065 = vadd.f32 %v124, %v1064
    %v1066 = vpop.f32.mrf.mxu0
    %1067 = vdwg.mxu0
    %1068 = vmatprep.subr.bf16.mxu0 0
    %1069 = vmatpush1.bf16.msra.mxu0 0
    %1070 = vmatprep.subr.bf16.mxu0 0
    %1071 = vmatpush1.bf16.msra.mxu0 0
    %1072 = vmatprep.subr.bf16.mxu0 0
    %1073 = vmatpush1.bf16.msra.mxu0 0
    %1074 = vmatprep.subr.bf16.mxu0 0
    %1075 = vmatpush1.bf16.msra.mxu0 0
    %1076 = vmatprep.subr.bf16.mxu0 0
    %1077 = vmatpush1.bf16.msra.mxu0 0
    %1078 = vmatprep.subr.bf16.mxu0 0
    %1079 = vmatpush1.bf16.msra.mxu0 0
    %1080 = vmatprep.subr.bf16.mxu0 0
    %1081 = vmatpush1.bf16.msra.mxu0 %v198
    %1082 = vmatprep.subr.bf16.mxu0 0
    %1083 = vmatpush1.bf16.msra.mxu0 %v197
    %1084 = vmatprep.subr.bf16.mxu0 0
    %1085 = vmatpush2.bf16.msra.mxu0 0
    %1086 = vmatprep.subr.bf16.mxu0 0
    %1087 = vmatpush2.bf16.msra.mxu0 0
    %1088 = vmatprep.subr.bf16.mxu0 0
    %1089 = vmatpush2.bf16.msra.mxu0 0
    %1090 = vmatprep.subr.bf16.mxu0 0
    %1091 = vmatpush2.bf16.msra.mxu0 0
    %1092 = vmatprep.subr.bf16.mxu0 0
    %1093 = vmatpush2.bf16.msra.mxu0 0
    %1094 = vmatprep.subr.bf16.mxu0 0
    %1095 = vmatpush2.bf16.msra.mxu0 0
    %1096 = vmatprep.subr.bf16.mxu0 0
    %1097 = vmatpush2.bf16.msra.mxu0 0
    %1098 = vmatprep.subr.bf16.mxu0 0
    %1099 = vmatpush2.bf16.msra.mxu0 0
    %1100 = vmatprep.mubr.bf16.mxu0 0
    %1101 = vmatmul.mubr.bf16.gmra.mxu0 %v1025
    %v1102 = vpop.f32.mrf.mxu0
    %v1103 = vadd.f32 %v187, %v1102
    %v1104 = vpop.f32.mrf.mxu0
    %v1105 = vpop.f32.mrf.mxu0
    %v1106 = vadd.f32 %v187, %v1105
    %v1107 = vpop.f32.mrf.mxu0
    %1108 = vdwg.mxu0
    %v1109 = vpack.c.bf16 %v1065, %v1062
    %v1111 = vunpack.c.l.b16 %v1109
    %v1112 = vunpack.c.h.b16 %v1109
    %v1113 = vpack.c.b16 %v1111, %v1111
    %v1114 = vpack.c.b16 %v1112, %v1112
    %v1115 = vpack.c.bf16 %v1106, %v1103
    %v1117 = vunpack.c.l.b16 %v1115
    %v1118 = vunpack.c.h.b16 %v1115
    %v1119 = vpack.c.b16 %v1117, %v1117
    %v1120 = vpack.c.b16 %v1118, %v1118
    %v1122 = vsel %vm258, %v1113, 0
    %1124 = vmatprep.subr.bf16.mxu0 0
    %1125 = vmatpush1.bf16.msra.mxu0 0
    %1126 = vmatprep.subr.bf16.mxu0 0
    %1127 = vmatpush1.bf16.msra.mxu0 0
    %1128 = vmatprep.subr.bf16.mxu0 0
    %1129 = vmatpush1.bf16.msra.mxu0 0
    %1130 = vmatprep.subr.bf16.mxu0 0
    %1131 = vmatpush1.bf16.msra.mxu0 0
    %1132 = vmatprep.subr.bf16.mxu0 0
    %1133 = vmatpush1.bf16.msra.mxu0 0
    %1134 = vmatprep.subr.bf16.mxu0 0
    %1135 = vmatpush1.bf16.msra.mxu0 0
    %1136 = vmatprep.subr.bf16.mxu0 0
    %1137 = vmatpush1.bf16.msra.mxu0 0
    %1138 = vmatprep.subr.bf16.mxu0 0
    %1139 = vmatpush1.bf16.msra.mxu0 %v1122
    %1140 = vmatprep.subr.bf16.mxu0 0
    %1141 = vmatpush2.bf16.msra.mxu0 0
    %1142 = vmatprep.subr.bf16.mxu0 0
    %1143 = vmatpush2.bf16.msra.mxu0 0
    %1144 = vmatprep.subr.bf16.mxu0 0
    %1145 = vmatpush2.bf16.msra.mxu0 0
    %1146 = vmatprep.subr.bf16.mxu0 0
    %1147 = vmatpush2.bf16.msra.mxu0 0
    %1148 = vmatprep.subr.bf16.mxu0 0
    %1149 = vmatpush2.bf16.msra.mxu0 0
    %1150 = vmatprep.subr.bf16.mxu0 0
    %1151 = vmatpush2.bf16.msra.mxu0 0
    %1152 = vmatprep.subr.bf16.mxu0 0
    %1153 = vmatpush2.bf16.msra.mxu0 0
    %1154 = vmatprep.subr.bf16.mxu0 0
    %1155 = vmatpush2.bf16.msra.mxu0 0
    %1156 = vmatprep.mubr.bf16.mxu0 0
    %1157 = vmatmul.mubr.bf16.gmra.mxu0 %v256
    %v1158 = vpop.f32.mrf.mxu0
    %v1159 = vadd.f32 0.0, %v1158
    %v1160 = vpop.f32.mrf.mxu0
    %v1161 = vpop.f32.mrf.mxu0
    %v1162 = vpop.f32.mrf.mxu0
    %1163 = vdwg.mxu0
    %v1165 = vsel %vm258, %v1114, 0
    %1167 = vmatprep.subr.bf16.mxu0 0
    %1168 = vmatpush1.bf16.msra.mxu0 0
    %1169 = vmatprep.subr.bf16.mxu0 0
    %1170 = vmatpush1.bf16.msra.mxu0 0
    %1171 = vmatprep.subr.bf16.mxu0 0
    %1172 = vmatpush1.bf16.msra.mxu0 0
    %1173 = vmatprep.subr.bf16.mxu0 0
    %1174 = vmatpush1.bf16.msra.mxu0 0
    %1175 = vmatprep.subr.bf16.mxu0 0
    %1176 = vmatpush1.bf16.msra.mxu0 0
    %1177 = vmatprep.subr.bf16.mxu0 0
    %1178 = vmatpush1.bf16.msra.mxu0 0
    %1179 = vmatprep.subr.bf16.mxu0 0
    %1180 = vmatpush1.bf16.msra.mxu0 0
    %1181 = vmatprep.subr.bf16.mxu0 0
    %1182 = vmatpush1.bf16.msra.mxu0 %v1165
    %1183 = vmatprep.subr.bf16.mxu0 0
    %1184 = vmatpush2.bf16.msra.mxu0 0
    %1185 = vmatprep.subr.bf16.mxu0 0
    %1186 = vmatpush2.bf16.msra.mxu0 0
    %1187 = vmatprep.subr.bf16.mxu0 0
    %1188 = vmatpush2.bf16.msra.mxu0 0
    %1189 = vmatprep.subr.bf16.mxu0 0
    %1190 = vmatpush2.bf16.msra.mxu0 0
    %1191 = vmatprep.subr.bf16.mxu0 0
    %1192 = vmatpush2.bf16.msra.mxu0 0
    %1193 = vmatprep.subr.bf16.mxu0 0
    %1194 = vmatpush2.bf16.msra.mxu0 0
    %1195 = vmatprep.subr.bf16.mxu0 0
    %1196 = vmatpush2.bf16.msra.mxu0 0
    %1197 = vmatprep.subr.bf16.mxu0 0
    %1198 = vmatpush2.bf16.msra.mxu0 0
    %1199 = vmatprep.mubr.bf16.mxu0 0
    %1200 = vmatmul.mubr.bf16.gmra.mxu0 %v303
    %v1201 = vpop.f32.mrf.mxu0
    %v1202 = vadd.f32 0.0, %v1201
    %v1203 = vpop.f32.mrf.mxu0
    %v1204 = vpop.f32.mrf.mxu0
    %v1205 = vpop.f32.mrf.mxu0
    %1206 = vdwg.mxu0
    %v1207 = vadd.f32 %v1159, %v352
    %v1208 = vadd.f32 %v1202, %v352
    %v1210 = vsel %vm258, %v1119, 0
    %1212 = vmatprep.subr.bf16.mxu0 0
    %1213 = vmatpush1.bf16.msra.mxu0 0
    %1214 = vmatprep.subr.bf16.mxu0 0
    %1215 = vmatpush1.bf16.msra.mxu0 0
    %1216 = vmatprep.subr.bf16.mxu0 0
    %1217 = vmatpush1.bf16.msra.mxu0 0
    %1218 = vmatprep.subr.bf16.mxu0 0
    %1219 = vmatpush1.bf16.msra.mxu0 0
    %1220 = vmatprep.subr.bf16.mxu0 0
    %1221 = vmatpush1.bf16.msra.mxu0 0
    %1222 = vmatprep.subr.bf16.mxu0 0
    %1223 = vmatpush1.bf16.msra.mxu0 0
    %1224 = vmatprep.subr.bf16.mxu0 0
    %1225 = vmatpush1.bf16.msra.mxu0 0
    %1226 = vmatprep.subr.bf16.mxu0 0
    %1227 = vmatpush1.bf16.msra.mxu0 %v1210
    %1228 = vmatprep.subr.bf16.mxu0 0
    %1229 = vmatpush2.bf16.msra.mxu0 0
    %1230 = vmatprep.subr.bf16.mxu0 0
    %1231 = vmatpush2.bf16.msra.mxu0 0
    %1232 = vmatprep.subr.bf16.mxu0 0
    %1233 = vmatpush2.bf16.msra.mxu0 0
    %1234 = vmatprep.subr.bf16.mxu0 0
    %1235 = vmatpush2.bf16.msra.mxu0 0
    %1236 = vmatprep.subr.bf16.mxu0 0
    %1237 = vmatpush2.bf16.msra.mxu0 0
    %1238 = vmatprep.subr.bf16.mxu0 0
    %1239 = vmatpush2.bf16.msra.mxu0 0
    %1240 = vmatprep.subr.bf16.mxu0 0
    %1241 = vmatpush2.bf16.msra.mxu0 0
    %1242 = vmatprep.subr.bf16.mxu0 0
    %1243 = vmatpush2.bf16.msra.mxu0 0
    %1244 = vmatprep.mubr.bf16.mxu0 0
    %1245 = vmatmul.mubr.bf16.gmra.mxu0 %v357
    %v1246 = vpop.f32.mrf.mxu0
    %v1247 = vadd.f32 0.0, %v1246
    %v1248 = vpop.f32.mrf.mxu0
    %v1249 = vpop.f32.mrf.mxu0
    %v1250 = vpop.f32.mrf.mxu0
    %1251 = vdwg.mxu0
    %v1253 = vsel %vm258, %v1120, 0
    %1255 = vmatprep.subr.bf16.mxu0 0
    %1256 = vmatpush1.bf16.msra.mxu0 0
    %1257 = vmatprep.subr.bf16.mxu0 0
    %1258 = vmatpush1.bf16.msra.mxu0 0
    %1259 = vmatprep.subr.bf16.mxu0 0
    %1260 = vmatpush1.bf16.msra.mxu0 0
    %1261 = vmatprep.subr.bf16.mxu0 0
    %1262 = vmatpush1.bf16.msra.mxu0 0
    %1263 = vmatprep.subr.bf16.mxu0 0
    %1264 = vmatpush1.bf16.msra.mxu0 0
    %1265 = vmatprep.subr.bf16.mxu0 0
    %1266 = vmatpush1.bf16.msra.mxu0 0
    %1267 = vmatprep.subr.bf16.mxu0 0
    %1268 = vmatpush1.bf16.msra.mxu0 0
    %1269 = vmatprep.subr.bf16.mxu0 0
    %1270 = vmatpush1.bf16.msra.mxu0 %v1253
    %1271 = vmatprep.subr.bf16.mxu0 0
    %1272 = vmatpush2.bf16.msra.mxu0 0
    %1273 = vmatprep.subr.bf16.mxu0 0
    %1274 = vmatpush2.bf16.msra.mxu0 0
    %1275 = vmatprep.subr.bf16.mxu0 0
    %1276 = vmatpush2.bf16.msra.mxu0 0
    %1277 = vmatprep.subr.bf16.mxu0 0
    %1278 = vmatpush2.bf16.msra.mxu0 0
    %1279 = vmatprep.subr.bf16.mxu0 0
    %1280 = vmatpush2.bf16.msra.mxu0 0
    %1281 = vmatprep.subr.bf16.mxu0 0
    %1282 = vmatpush2.bf16.msra.mxu0 0
    %1283 = vmatprep.subr.bf16.mxu0 0
    %1284 = vmatpush2.bf16.msra.mxu0 0
    %1285 = vmatprep.subr.bf16.mxu0 0
    %1286 = vmatpush2.bf16.msra.mxu0 0
    %1287 = vmatprep.mubr.bf16.mxu0 0
    %1288 = vmatmul.mubr.bf16.gmra.mxu0 %v403
    %v1289 = vpop.f32.mrf.mxu0
    %v1290 = vadd.f32 0.0, %v1289
    %v1291 = vpop.f32.mrf.mxu0
    %v1292 = vpop.f32.mrf.mxu0
    %v1293 = vpop.f32.mrf.mxu0
    %1294 = vdwg.mxu0
    %v1295 = vadd.f32 %v1247, %v452
    %v1296 = vadd.f32 %v1290, %v452
    %v1297 = vpack.c.bf16 %v1208, %v1207
    %v1298 = vpack.c.bf16 %v1296, %v1295
    %v1300 = vsel %vm138, %v1298, 0
    %1302 = vmatprep.subr.bf16.mxu0 0
    %1303 = vmatpush1.bf16.msra.mxu0 0
    %1304 = vmatprep.subr.bf16.mxu0 0
    %1305 = vmatpush1.bf16.msra.mxu0 0
    %1306 = vmatprep.subr.bf16.mxu0 0
    %1307 = vmatpush1.bf16.msra.mxu0 0
    %1308 = vmatprep.subr.bf16.mxu0 0
    %1309 = vmatpush1.bf16.msra.mxu0 0
    %1310 = vmatprep.subr.bf16.mxu0 0
    %1311 = vmatpush1.bf16.msra.mxu0 0
    %1312 = vmatprep.subr.bf16.mxu0 0
    %1313 = vmatpush1.bf16.msra.mxu0 0
    %1314 = vmatprep.subr.bf16.mxu0 0
    %1315 = vmatpush1.bf16.msra.mxu0 %v467
    %1316 = vmatprep.subr.bf16.mxu0 0
    %1317 = vmatpush1.bf16.msra.mxu0 %v466
    %1318 = vmatprep.subr.bf16.mxu0 0
    %1319 = vmatpush2.bf16.msra.mxu0 0
    %1320 = vmatprep.subr.bf16.mxu0 0
    %1321 = vmatpush2.bf16.msra.mxu0 0
    %1322 = vmatprep.subr.bf16.mxu0 0
    %1323 = vmatpush2.bf16.msra.mxu0 0
    %1324 = vmatprep.subr.bf16.mxu0 0
    %1325 = vmatpush2.bf16.msra.mxu0 0
    %1326 = vmatprep.subr.bf16.mxu0 0
    %1327 = vmatpush2.bf16.msra.mxu0 0
    %1328 = vmatprep.subr.bf16.mxu0 0
    %1329 = vmatpush2.bf16.msra.mxu0 0
    %1330 = vmatprep.subr.bf16.mxu0 0
    %1331 = vmatpush2.bf16.msra.mxu0 0
    %1332 = vmatprep.subr.bf16.mxu0 0
    %1333 = vmatpush2.bf16.msra.mxu0 0
    %1334 = vmatprep.mubr.bf16.mxu0 0
    %1335 = vmatmul.mubr.bf16.gmra.mxu0 %v1300
    %v1336 = vpop.f32.mrf.mxu0
    %v1337 = vadd.f32 0.0, %v1336
    %v1338 = vpop.f32.mrf.mxu0
    %v1339 = vpop.f32.mrf.mxu0
    %v1340 = vadd.f32 0.0, %v1339
    %v1341 = vpop.f32.mrf.mxu0
    %1342 = vdwg.mxu0
    %v1344 = vsel %vm138, %v1297, 0
    %1346 = vmatprep.subr.bf16.mxu0 0
    %1347 = vmatpush1.bf16.msra.mxu0 0
    %1348 = vmatprep.subr.bf16.mxu0 0
    %1349 = vmatpush1.bf16.msra.mxu0 0
    %1350 = vmatprep.subr.bf16.mxu0 0
    %1351 = vmatpush1.bf16.msra.mxu0 0
    %1352 = vmatprep.subr.bf16.mxu0 0
    %1353 = vmatpush1.bf16.msra.mxu0 0
    %1354 = vmatprep.subr.bf16.mxu0 0
    %1355 = vmatpush1.bf16.msra.mxu0 0
    %1356 = vmatprep.subr.bf16.mxu0 0
    %1357 = vmatpush1.bf16.msra.mxu0 0
    %1358 = vmatprep.subr.bf16.mxu0 0
    %1359 = vmatpush1.bf16.msra.mxu0 %v523
    %1360 = vmatprep.subr.bf16.mxu0 0
    %1361 = vmatpush1.bf16.msra.mxu0 %v522
    %1362 = vmatprep.subr.bf16.mxu0 0
    %1363 = vmatpush2.bf16.msra.mxu0 0
    %1364 = vmatprep.subr.bf16.mxu0 0
    %1365 = vmatpush2.bf16.msra.mxu0 0
    %1366 = vmatprep.subr.bf16.mxu0 0
    %1367 = vmatpush2.bf16.msra.mxu0 0
    %1368 = vmatprep.subr.bf16.mxu0 0
    %1369 = vmatpush2.bf16.msra.mxu0 0
    %1370 = vmatprep.subr.bf16.mxu0 0
    %1371 = vmatpush2.bf16.msra.mxu0 0
    %1372 = vmatprep.subr.bf16.mxu0 0
    %1373 = vmatpush2.bf16.msra.mxu0 0
    %1374 = vmatprep.subr.bf16.mxu0 0
    %1375 = vmatpush2.bf16.msra.mxu0 0
    %1376 = vmatprep.subr.bf16.mxu0 0
    %1377 = vmatpush2.bf16.msra.mxu0 0
    %1378 = vmatprep.mubr.bf16.mxu0 0
    %1379 = vmatmul.mubr.bf16.gmra.mxu0 %v1344
    %v1380 = vpop.f32.mrf.mxu0
    %v1381 = vadd.f32 %v1337, %v1380
    %v1382 = vpop.f32.mrf.mxu0
    %v1383 = vpop.f32.mrf.mxu0
    %v1384 = vadd.f32 %v1340, %v1383
    %v1385 = vpop.f32.mrf.mxu0
    %1386 = vdwg.mxu0
    %v1387 = vadd.f32 %v1381, %v574
    %v1388 = vadd.f32 %v1384, %v574
    %1389 = vmatprep.subr.bf16.mxu0 0
    %1390 = vmatpush1.bf16.msra.mxu0 0
    %1391 = vmatprep.subr.bf16.mxu0 0
    %1392 = vmatpush1.bf16.msra.mxu0 0
    %1393 = vmatprep.subr.bf16.mxu0 0
    %1394 = vmatpush1.bf16.msra.mxu0 0
    %1395 = vmatprep.subr.bf16.mxu0 0
    %1396 = vmatpush1.bf16.msra.mxu0 0
    %1397 = vmatprep.subr.bf16.mxu0 0
    %1398 = vmatpush1.bf16.msra.mxu0 0
    %1399 = vmatprep.subr.bf16.mxu0 0
    %1400 = vmatpush1.bf16.msra.mxu0 0
    %1401 = vmatprep.subr.bf16.mxu0 0
    %1402 = vmatpush1.bf16.msra.mxu0 %v593
    %1403 = vmatprep.subr.bf16.mxu0 0
    %1404 = vmatpush1.bf16.msra.mxu0 %v592
    %1405 = vmatprep.subr.bf16.mxu0 0
    %1406 = vmatpush2.bf16.msra.mxu0 0
    %1407 = vmatprep.subr.bf16.mxu0 0
    %1408 = vmatpush2.bf16.msra.mxu0 0
    %1409 = vmatprep.subr.bf16.mxu0 0
    %1410 = vmatpush2.bf16.msra.mxu0 0
    %1411 = vmatprep.subr.bf16.mxu0 0
    %1412 = vmatpush2.bf16.msra.mxu0 0
    %1413 = vmatprep.subr.bf16.mxu0 0
    %1414 = vmatpush2.bf16.msra.mxu0 0
    %1415 = vmatprep.subr.bf16.mxu0 0
    %1416 = vmatpush2.bf16.msra.mxu0 0
    %1417 = vmatprep.subr.bf16.mxu0 0
    %1418 = vmatpush2.bf16.msra.mxu0 0
    %1419 = vmatprep.subr.bf16.mxu0 0
    %1420 = vmatpush2.bf16.msra.mxu0 0
    %1421 = vmatprep.mubr.bf16.mxu0 0
    %1422 = vmatmul.mubr.bf16.gmra.mxu0 %v1025
    %v1423 = vpop.f32.mrf.mxu0
    %v1424 = vadd.f32 %v582, %v1423
    %v1425 = vpop.f32.mrf.mxu0
    %v1426 = vpop.f32.mrf.mxu0
    %v1427 = vadd.f32 %v582, %v1426
    %v1428 = vpop.f32.mrf.mxu0
    %1429 = vdwg.mxu0
    %1430 = vmatprep.subr.bf16.mxu0 0
    %1431 = vmatpush1.bf16.msra.mxu0 0
    %1432 = vmatprep.subr.bf16.mxu0 0
    %1433 = vmatpush1.bf16.msra.mxu0 0
    %1434 = vmatprep.subr.bf16.mxu0 0
    %1435 = vmatpush1.bf16.msra.mxu0 0
    %1436 = vmatprep.subr.bf16.mxu0 0
    %1437 = vmatpush1.bf16.msra.mxu0 0
    %1438 = vmatprep.subr.bf16.mxu0 0
    %1439 = vmatpush1.bf16.msra.mxu0 0
    %1440 = vmatprep.subr.bf16.mxu0 0
    %1441 = vmatpush1.bf16.msra.mxu0 0
    %1442 = vmatprep.subr.bf16.mxu0 0
    %1443 = vmatpush1.bf16.msra.mxu0 %v646
    %1444 = vmatprep.subr.bf16.mxu0 0
    %1445 = vmatpush1.bf16.msra.mxu0 %v645
    %1446 = vmatprep.subr.bf16.mxu0 0
    %1447 = vmatpush2.bf16.msra.mxu0 0
    %1448 = vmatprep.subr.bf16.mxu0 0
    %1449 = vmatpush2.bf16.msra.mxu0 0
    %1450 = vmatprep.subr.bf16.mxu0 0
    %1451 = vmatpush2.bf16.msra.mxu0 0
    %1452 = vmatprep.subr.bf16.mxu0 0
    %1453 = vmatpush2.bf16.msra.mxu0 0
    %1454 = vmatprep.subr.bf16.mxu0 0
    %1455 = vmatpush2.bf16.msra.mxu0 0
    %1456 = vmatprep.subr.bf16.mxu0 0
    %1457 = vmatpush2.bf16.msra.mxu0 0
    %1458 = vmatprep.subr.bf16.mxu0 0
    %1459 = vmatpush2.bf16.msra.mxu0 0
    %1460 = vmatprep.subr.bf16.mxu0 0
    %1461 = vmatpush2.bf16.msra.mxu0 0
    %1462 = vmatprep.mubr.bf16.mxu0 0
    %1463 = vmatmul.mubr.bf16.gmra.mxu0 %v1300
    %v1464 = vpop.f32.mrf.mxu0
    %v1465 = vadd.f32 0.0, %v1464
    %v1466 = vpop.f32.mrf.mxu0
    %v1467 = vpop.f32.mrf.mxu0
    %v1468 = vadd.f32 0.0, %v1467
    %v1469 = vpop.f32.mrf.mxu0
    %1470 = vdwg.mxu0
    %1471 = vmatprep.subr.bf16.mxu0 0
    %1472 = vmatpush1.bf16.msra.mxu0 0
    %1473 = vmatprep.subr.bf16.mxu0 0
    %1474 = vmatpush1.bf16.msra.mxu0 0
    %1475 = vmatprep.subr.bf16.mxu0 0
    %1476 = vmatpush1.bf16.msra.mxu0 0
    %1477 = vmatprep.subr.bf16.mxu0 0
    %1478 = vmatpush1.bf16.msra.mxu0 0
    %1479 = vmatprep.subr.bf16.mxu0 0
    %1480 = vmatpush1.bf16.msra.mxu0 0
    %1481 = vmatprep.subr.bf16.mxu0 0
    %1482 = vmatpush1.bf16.msra.mxu0 0
    %1483 = vmatprep.subr.bf16.mxu0 0
    %1484 = vmatpush1.bf16.msra.mxu0 %v699
    %1485 = vmatprep.subr.bf16.mxu0 0
    %1486 = vmatpush1.bf16.msra.mxu0 %v698
    %1487 = vmatprep.subr.bf16.mxu0 0
    %1488 = vmatpush2.bf16.msra.mxu0 0
    %1489 = vmatprep.subr.bf16.mxu0 0
    %1490 = vmatpush2.bf16.msra.mxu0 0
    %1491 = vmatprep.subr.bf16.mxu0 0
    %1492 = vmatpush2.bf16.msra.mxu0 0
    %1493 = vmatprep.subr.bf16.mxu0 0
    %1494 = vmatpush2.bf16.msra.mxu0 0
    %1495 = vmatprep.subr.bf16.mxu0 0
    %1496 = vmatpush2.bf16.msra.mxu0 0
    %1497 = vmatprep.subr.bf16.mxu0 0
    %1498 = vmatpush2.bf16.msra.mxu0 0
    %1499 = vmatprep.subr.bf16.mxu0 0
    %1500 = vmatpush2.bf16.msra.mxu0 0
    %1501 = vmatprep.subr.bf16.mxu0 0
    %1502 = vmatpush2.bf16.msra.mxu0 0
    %1503 = vmatprep.mubr.bf16.mxu0 0
    %1504 = vmatmul.mubr.bf16.gmra.mxu0 %v1344
    %v1505 = vpop.f32.mrf.mxu0
    %v1506 = vadd.f32 %v1465, %v1505
    %v1507 = vpop.f32.mrf.mxu0
    %v1508 = vpop.f32.mrf.mxu0
    %v1509 = vadd.f32 %v1468, %v1508
    %v1510 = vpop.f32.mrf.mxu0
    %1511 = vdwg.mxu0
    %v1512 = vadd.f32 %v1506, %v747
    %v1513 = vadd.f32 %v1509, %v747
    %1514 = vmatprep.subr.bf16.mxu0 0
    %1515 = vmatpush1.bf16.msra.mxu0 0
    %1516 = vmatprep.subr.bf16.mxu0 0
    %1517 = vmatpush1.bf16.msra.mxu0 0
    %1518 = vmatprep.subr.bf16.mxu0 0
    %1519 = vmatpush1.bf16.msra.mxu0 0
    %1520 = vmatprep.subr.bf16.mxu0 0
    %1521 = vmatpush1.bf16.msra.mxu0 0
    %1522 = vmatprep.subr.bf16.mxu0 0
    %1523 = vmatpush1.bf16.msra.mxu0 0
    %1524 = vmatprep.subr.bf16.mxu0 0
    %1525 = vmatpush1.bf16.msra.mxu0 0
    %1526 = vmatprep.subr.bf16.mxu0 0
    %1527 = vmatpush1.bf16.msra.mxu0 %v766
    %1528 = vmatprep.subr.bf16.mxu0 0
    %1529 = vmatpush1.bf16.msra.mxu0 %v765
    %1530 = vmatprep.subr.bf16.mxu0 0
    %1531 = vmatpush2.bf16.msra.mxu0 0
    %1532 = vmatprep.subr.bf16.mxu0 0
    %1533 = vmatpush2.bf16.msra.mxu0 0
    %1534 = vmatprep.subr.bf16.mxu0 0
    %1535 = vmatpush2.bf16.msra.mxu0 0
    %1536 = vmatprep.subr.bf16.mxu0 0
    %1537 = vmatpush2.bf16.msra.mxu0 0
    %1538 = vmatprep.subr.bf16.mxu0 0
    %1539 = vmatpush2.bf16.msra.mxu0 0
    %1540 = vmatprep.subr.bf16.mxu0 0
    %1541 = vmatpush2.bf16.msra.mxu0 0
    %1542 = vmatprep.subr.bf16.mxu0 0
    %1543 = vmatpush2.bf16.msra.mxu0 0
    %1544 = vmatprep.subr.bf16.mxu0 0
    %1545 = vmatpush2.bf16.msra.mxu0 0
    %1546 = vmatprep.mubr.bf16.mxu0 0
    %1547 = vmatmul.mubr.bf16.gmra.mxu0 %v1025
    %v1548 = vpop.f32.mrf.mxu0
    %v1549 = vadd.f32 %v755, %v1548
    %v1550 = vpop.f32.mrf.mxu0
    %v1551 = vpop.f32.mrf.mxu0
    %v1552 = vadd.f32 %v755, %v1551
    %v1553 = vpop.f32.mrf.mxu0
    %1554 = vdwg.mxu0
    %1555 = vmatprep.subr.bf16.mxu0 0
    %1556 = vmatpush1.bf16.msra.mxu0 0
    %1557 = vmatprep.subr.bf16.mxu0 0
    %1558 = vmatpush1.bf16.msra.mxu0 0
    %1559 = vmatprep.subr.bf16.mxu0 0
    %1560 = vmatpush1.bf16.msra.mxu0 0
    %1561 = vmatprep.subr.bf16.mxu0 0
    %1562 = vmatpush1.bf16.msra.mxu0 0
    %1563 = vmatprep.subr.bf16.mxu0 0
    %1564 = vmatpush1.bf16.msra.mxu0 0
    %1565 = vmatprep.subr.bf16.mxu0 0
    %1566 = vmatpush1.bf16.msra.mxu0 0
    %1567 = vmatprep.subr.bf16.mxu0 0
    %1568 = vmatpush1.bf16.msra.mxu0 %v819
    %1569 = vmatprep.subr.bf16.mxu0 0
    %1570 = vmatpush1.bf16.msra.mxu0 %v818
    %1571 = vmatprep.subr.bf16.mxu0 0
    %1572 = vmatpush2.bf16.msra.mxu0 0
    %1573 = vmatprep.subr.bf16.mxu0 0
    %1574 = vmatpush2.bf16.msra.mxu0 0
    %1575 = vmatprep.subr.bf16.mxu0 0
    %1576 = vmatpush2.bf16.msra.mxu0 0
    %1577 = vmatprep.subr.bf16.mxu0 0
    %1578 = vmatpush2.bf16.msra.mxu0 0
    %1579 = vmatprep.subr.bf16.mxu0 0
    %1580 = vmatpush2.bf16.msra.mxu0 0
    %1581 = vmatprep.subr.bf16.mxu0 0
    %1582 = vmatpush2.bf16.msra.mxu0 0
    %1583 = vmatprep.subr.bf16.mxu0 0
    %1584 = vmatpush2.bf16.msra.mxu0 0
    %1585 = vmatprep.subr.bf16.mxu0 0
    %1586 = vmatpush2.bf16.msra.mxu0 0
    %1587 = vmatprep.mubr.bf16.mxu0 0
    %1588 = vmatmul.mubr.bf16.gmra.mxu0 %v1300
    %v1589 = vpop.f32.mrf.mxu0
    %v1590 = vadd.f32 0.0, %v1589
    %v1591 = vpop.f32.mrf.mxu0
    %v1592 = vpop.f32.mrf.mxu0
    %v1593 = vadd.f32 0.0, %v1592
    %v1594 = vpop.f32.mrf.mxu0
    %1595 = vdwg.mxu0
    %1596 = vmatprep.subr.bf16.mxu0 0
    %1597 = vmatpush1.bf16.msra.mxu0 0
    %1598 = vmatprep.subr.bf16.mxu0 0
    %1599 = vmatpush1.bf16.msra.mxu0 0
    %1600 = vmatprep.subr.bf16.mxu0 0
    %1601 = vmatpush1.bf16.msra.mxu0 0
    %1602 = vmatprep.subr.bf16.mxu0 0
    %1603 = vmatpush1.bf16.msra.mxu0 0
    %1604 = vmatprep.subr.bf16.mxu0 0
    %1605 = vmatpush1.bf16.msra.mxu0 0
    %1606 = vmatprep.subr.bf16.mxu0 0
    %1607 = vmatpush1.bf16.msra.mxu0 0
    %1608 = vmatprep.subr.bf16.mxu0 0
    %1609 = vmatpush1.bf16.msra.mxu0 %v872
    %1610 = vmatprep.subr.bf16.mxu0 0
    %1611 = vmatpush1.bf16.msra.mxu0 %v871
    %1612 = vmatprep.subr.bf16.mxu0 0
    %1613 = vmatpush2.bf16.msra.mxu0 0
    %1614 = vmatprep.subr.bf16.mxu0 0
    %1615 = vmatpush2.bf16.msra.mxu0 0
    %1616 = vmatprep.subr.bf16.mxu0 0
    %1617 = vmatpush2.bf16.msra.mxu0 0
    %1618 = vmatprep.subr.bf16.mxu0 0
    %1619 = vmatpush2.bf16.msra.mxu0 0
    %1620 = vmatprep.subr.bf16.mxu0 0
    %1621 = vmatpush2.bf16.msra.mxu0 0
    %1622 = vmatprep.subr.bf16.mxu0 0
    %1623 = vmatpush2.bf16.msra.mxu0 0
    %1624 = vmatprep.subr.bf16.mxu0 0
    %1625 = vmatpush2.bf16.msra.mxu0 0
    %1626 = vmatprep.subr.bf16.mxu0 0
    %1627 = vmatpush2.bf16.msra.mxu0 0
    %1628 = vmatprep.mubr.bf16.mxu0 0
    %1629 = vmatmul.mubr.bf16.gmra.mxu0 %v1344
    %v1630 = vpop.f32.mrf.mxu0
    %v1631 = vadd.f32 %v1590, %v1630
    %v1632 = vpop.f32.mrf.mxu0
    %v1633 = vpop.f32.mrf.mxu0
    %v1634 = vadd.f32 %v1593, %v1633
    %v1635 = vpop.f32.mrf.mxu0
    %1636 = vdwg.mxu0
    %v1637 = vadd.f32 %v1631, %v920
    %v1638 = vadd.f32 %v1634, %v920
    %1639 = vmatprep.subr.bf16.mxu0 0
    %1640 = vmatpush1.bf16.msra.mxu0 0
    %1641 = vmatprep.subr.bf16.mxu0 0
    %1642 = vmatpush1.bf16.msra.mxu0 0
    %1643 = vmatprep.subr.bf16.mxu0 0
    %1644 = vmatpush1.bf16.msra.mxu0 0
    %1645 = vmatprep.subr.bf16.mxu0 0
    %1646 = vmatpush1.bf16.msra.mxu0 0
    %1647 = vmatprep.subr.bf16.mxu0 0
    %1648 = vmatpush1.bf16.msra.mxu0 0
    %1649 = vmatprep.subr.bf16.mxu0 0
    %1650 = vmatpush1.bf16.msra.mxu0 0
    %1651 = vmatprep.subr.bf16.mxu0 0
    %1652 = vmatpush1.bf16.msra.mxu0 %v939
    %1653 = vmatprep.subr.bf16.mxu0 0
    %1654 = vmatpush1.bf16.msra.mxu0 %v938
    %1655 = vmatprep.subr.bf16.mxu0 0
    %1656 = vmatpush2.bf16.msra.mxu0 0
    %1657 = vmatprep.subr.bf16.mxu0 0
    %1658 = vmatpush2.bf16.msra.mxu0 0
    %1659 = vmatprep.subr.bf16.mxu0 0
    %1660 = vmatpush2.bf16.msra.mxu0 0
    %1661 = vmatprep.subr.bf16.mxu0 0
    %1662 = vmatpush2.bf16.msra.mxu0 0
    %1663 = vmatprep.subr.bf16.mxu0 0
    %1664 = vmatpush2.bf16.msra.mxu0 0
    %1665 = vmatprep.subr.bf16.mxu0 0
    %1666 = vmatpush2.bf16.msra.mxu0 0
    %1667 = vmatprep.subr.bf16.mxu0 0
    %1668 = vmatpush2.bf16.msra.mxu0 0
    %1669 = vmatprep.subr.bf16.mxu0 0
    %1670 = vmatpush2.bf16.msra.mxu0 0
    %1671 = vmatprep.mubr.bf16.mxu0 0
    %1672 = vmatmul.mubr.bf16.gmra.mxu0 %v1025
    %v1673 = vpop.f32.mrf.mxu0
    %v1674 = vadd.f32 %v928, %v1673
    %v1675 = vpop.f32.mrf.mxu0
    %v1676 = vpop.f32.mrf.mxu0
    %v1677 = vadd.f32 %v928, %v1676
    %v1678 = vpop.f32.mrf.mxu0
    %1679 = vdwg.mxu0
    %v1680 = vadd.f32 %v1387, %v1424
    %v1681 = vadd.f32 %v1388, %v1427
    %v1682 = vxor.u32 %v1680, 2147483648
    %v1683 = vxor.u32 %v1681, 2147483648
    %v1684 = vmul.f32 %v1682, 1.442695
    %v1685 = vpow.pop %v1684
    %v1686 = vmul.f32 %v1683, 1.442695
    %v1687 = vpow.pop %v1686
    %v1688 = vadd.f32 %v1685, 1.0
    %v1689 = vadd.f32 %v1687, 1.0
    %v1690 = vrcp.pop %v1688
    %v1691 = vmul.f32 1.0, %v1690
    %v1692 = vrcp.pop %v1689
    %v1693 = vmul.f32 1.0, %v1692
    %v1694 = vadd.f32 %v1512, %v1549
    %v1695 = vadd.f32 %v1513, %v1552
    %v1696 = vxor.u32 %v1694, 2147483648
    %v1697 = vxor.u32 %v1695, 2147483648
    %v1698 = vmul.f32 %v1696, 1.442695
    %v1699 = vpow.pop %v1698
    %v1700 = vmul.f32 %v1697, 1.442695
    %v1701 = vpow.pop %v1700
    %v1702 = vadd.f32 %v1699, 1.0
    %v1703 = vadd.f32 %v1701, 1.0
    %v1704 = vrcp.pop %v1702
    %v1705 = vmul.f32 1.0, %v1704
    %v1706 = vrcp.pop %v1703
    %v1707 = vmul.f32 1.0, %v1706
    %v1708 = vmul.f32 %v1691, %v1674
    %v1709 = vmul.f32 %v1693, %v1677
    %v1710 = vadd.f32 %v1637, %v1708
    %v1711 = vadd.f32 %v1638, %v1709
    %v1712 = vtanh.pop %v1710
    %v1713 = vtanh.pop %v1711
    %v1714 = vsub.f32 %v1021, %v1712
    %v1715 = vsub.f32 %v1022, %v1713
    %v1716 = vmul.f32 %v1705, %v1714
    %v1717 = vmul.f32 %v1707, %v1715
    %v1718 = vadd.f32 %v1712, %v1716
    %v1719 = vadd.f32 %v1713, %v1717
    %1720 = vst.msk [vmem:[#allocation2] sm:$0xff] %vm138, %v1718
    %1721 = vst.msk [vmem:[#allocation2 + $0x8] sm:$0xff] %vm138, %v1719
    // Predicated region
    $region58: #{gnn_forward.1} parent=1 // pred_check
      _
    $region59: #{gnn_forward.1} parent=1 // pred_check_branch
      %1723 = sbr.rel (0) target = $region61
    $region60: #{gnn_forward.1} parent=1 // pred_region
      %s1725 = ssub.s32 256, 256
      %1726 = vsyncadd [#allocation3], %s1725
      %s1727 = sshll.u32 [#allocation2], 4
      %s1728 = int_to_ptr.vmem [resolvable:$true] %s1727
      %1733 = dma.vmem_to_hbm [thread:$0]  %s1728, 256, %s14, [#allocation3], 128, 128, 8
    $region61: #{gnn_forward.1} parent=1 // pred_fallthru
      _
    // Predicated region
    $region62: #{gnn_forward.1} parent=1 // pred_check
      _
    $region63: #{gnn_forward.1} parent=1 // pred_check_branch
      %1735 = sbr.rel (0) target = $region65
    $region64: #{gnn_forward.1} parent=1 // pred_region
      %1736 = dma.done [#allocation3], 256
    $region65: #{gnn_forward.1} parent=1 // pred_fallthru
      _
    %1737 = vsyncpa [#allocation3], 1

</llo_original>
